<compile_context>
chip_gen: v5e
topology: v5e:2x2
jax: 0.10.0
libtpu: 0.0.40
codegen_flags: <defaults>
</compile_context>

<pallas_src>
import functools

import jax
import jax.numpy as jnp
from jax.experimental import pallas as pl
from jax.experimental.pallas import tpu as pltpu


def afm_kernel(num_fields, x_ref, gnn_ref, w_ref, b_ref, out_ref):
    """Per-grid-step block shapes (batch-in-lanes layout):
         x_ref   : (F, E, TB)
         gnn_ref : (A, TB)
         w_ref   : (A, E)      -- attention weight, fm = W @ ip
         b_ref   : (A, 1)
         out_ref : (A + E, TB) -- [gnn | attn_output] fused concat
    """
    F_ = num_fields
    E = x_ref.shape[1]
    TB = x_ref.shape[2]
    A = w_ref.shape[0]

    # Load each field once: (E, TB) slabs, batch in lanes.
    fields = [x_ref[i] for i in range(F_)]

    # Pairwise (i < j) elementwise products -- fully lane-dense VPU work.
    prods = []
    for i in range(F_ - 1):
        for j in range(i + 1, F_):
            prods.append(fields[i] * fields[j])
    P = len(prods)

    # Single materialization of the inner products: lane-axis concat so the
    # attention Linear is one flattened MXU matmul (A,E) @ (E, P*TB).
    ip = jnp.concatenate(prods, axis=1)                       # (E, P*TB)
    fm = jnp.dot(w_ref[...], ip, preferred_element_type=jnp.float32)
    fm = jnp.maximum(fm + b_ref[...], 0.0)                    # one bias bcast

    gnn = gnn_ref[...].astype(jnp.float32)                    # (A, TB)

    # Per-pair attention logits: static 128-aligned lane slices of fm,
    # elementwise mul with gnn, sublane reduce over A -> (1, TB) rows.
    score_rows = []
    for p in range(P):
        fm_p = fm[:, p * TB:(p + 1) * TB]                     # (A, TB)
        score_rows.append(jnp.sum(fm_p * gnn, axis=0, keepdims=True))

    # Softmax over the pair axis, computed on lane-dense (1, TB) rows.
    m = score_rows[0]
    for p in range(1, P):
        m = jnp.maximum(m, score_rows[p])
    e_rows = [jnp.exp(s - m) for s in score_rows]             # EUP, lane-dense
    denom = e_rows[0]
    for p in range(1, P):
        denom = denom + e_rows[p]
    inv = pl.reciprocal(denom, approx=True)                   # EUP slot
    inv = inv * (2.0 - denom * inv)                           # 1 NR step -> ~f32
    inv = inv * float(P)                                      # fold the *P scale

    # Weighted sum of inner products, reusing lane slices of the same ip
    # buffer (no second materialization of the pair products).
    acc = ip[:, 0:TB] * (e_rows[0] * inv)                     # (E, TB)
    for p in range(1, P):
        acc = acc + ip[:, p * TB:(p + 1) * TB] * (e_rows[p] * inv)

    # Fused concat output: [gnn_feature | attn_output], lane-dense stores.
    out_ref[:A, :] = gnn.astype(out_ref.dtype)
    out_ref[A:, :] = acc.astype(out_ref.dtype)


def _choose_batch_tile(B):
    """Lane-dense batch tiles (multiples of 128); keep >=2 grid steps when
    possible so the v7x megacore can shard the parallel batch axis."""
    if B <= 128:
        return 128
    if B <= 1024:
        return 128 * pl.cdiv(pl.cdiv(B, 2), 128)
    return 512


def _vmem_limit_bytes(tb, F_, E, A, P):
    itemsize = 4
    # double-buffered pipeline blocks (inputs + output)
    io = 2 * (F_ * E * tb + A * tb + A * E + A + (A + E) * tb) * itemsize
    # in-kernel intermediates: ip (E,P*tb), fm (A,P*tb), softmax rows, acc, gnn
    inter = (E * P * tb + A * P * tb + 8 * E * tb + 8 * A * tb) * itemsize
    need = io + inter
    return int(min(max(2 * need, 16 * 1024 * 1024), 48 * 1024 * 1024))


def afm_forward(gnn_feature, x, w_att, b_att, *, tb=None):
    """gnn_feature: (B, A), x: (B, F, E), w_att: (A, E), b_att: (A,)."""
    B, F_, E = x.shape
    A = w_att.shape[0]
    P = F_ * (F_ - 1) // 2
    out_dtype = x.dtype

    if tb is None:
        tb = _choose_batch_tile(B)
    num_tiles = pl.cdiv(B, tb)
    B_pad = num_tiles * tb

    # Batch-in-lanes layout (wrapper-side layout plumbing is cheap).
    x_t = jnp.transpose(x, (1, 2, 0))                  # (F, E, B)
    gnn_t = jnp.transpose(gnn_feature, (1, 0))         # (A, B)
    if B_pad != B:
        pad = B_pad - B
        # Padded columns: zero fields -> zero products -> finite softmax ->
        # zero attn output; sliced off below.
        x_t = jnp.pad(x_t, ((0, 0), (0, 0), (0, pad)))
        gnn_t = jnp.pad(gnn_t, ((0, 0), (0, pad)))

    w = w_att.astype(jnp.float32)                      # (A, E): fm = W @ ip
    b2 = b_att.reshape(A, 1).astype(jnp.float32)       # (A, 1)

    kernel = functools.partial(afm_kernel, F_)

    cost = pl.CostEstimate(
        flops=2 * B_pad * P * E * A + 8 * B_pad * P * E + 2 * B_pad * P * A,
        transcendentals=B_pad * P,
        bytes_accessed=4 * (x_t.size + gnn_t.size + w.size + b2.size
                            + B_pad * (A + E)),
    )

    out_t = pl.pallas_call(
        kernel,
        out_shape=jax.ShapeDtypeStruct((A + E, B_pad), out_dtype),
        grid_spec=pltpu.PrefetchScalarGridSpec(
            num_scalar_prefetch=0,
            grid=(num_tiles,),
            in_specs=[
                pl.BlockSpec((F_, E, tb), lambda b: (0, 0, b)),  # x batch tile
                pl.BlockSpec((A, tb), lambda b: (0, b)),         # gnn batch tile
                pl.BlockSpec((A, E), lambda b: (0, 0)),          # W (resident)
                pl.BlockSpec((A, 1), lambda b: (0, 0)),          # bias (resident)
            ],
            out_specs=pl.BlockSpec((A + E, tb), lambda b: (0, b)),
        ),
        compiler_params=pltpu.CompilerParams(
            dimension_semantics=("parallel",),
            vmem_limit_bytes=_vmem_limit_bytes(tb, F_, E, A, P),
        ),
        cost_estimate=cost,
    )(x_t, gnn_t, w, b2)

    # Back to the module's (B, A+E) layout.
    return jnp.transpose(out_t[:, :B], (1, 0))


def _make_pairs(num_fields):
    row, col = [], []
    for i in range(num_fields - 1):
        for j in range(i + 1, num_fields):
            row.append(i)
            col.append(j)
    return jnp.array(row, dtype=jnp.int32), jnp.array(col, dtype=jnp.int32)


def afm_reference(gnn_feature, x, w_att, b_att):
    """Pure-JAX reference mirroring the PyTorch forward (eval mode)."""
    B, F_, E = x.shape
    row, col = _make_pairs(F_)
    p = x[:, row, :]
    q = x[:, col, :]
    ip = p * q
    fm = jax.nn.relu(jnp.einsum('bpe,ae->bpa', ip, w_att) + b_att)
    scores = jnp.einsum('bpa,ba->bp', fm, gnn_feature)
    attn = jax.nn.softmax(scores, axis=1)[..., None]
    out = jnp.sum(attn * ip, axis=1) * ip.shape[1]
    return jnp.concatenate([gnn_feature, out], axis=1)


if __name__ == "__main__":
    # Small, module-consistent shapes. B is deliberately not a multiple of the
    # batch tile (exercises padding) and yields a 2-step parallel grid.
    B = 200         # batch
    F_ = 8          # num_fields -> P = 28 pairs
    E = 32          # embed_dim
    A = 32          # attn_size (== gnn_feature dim, forced by interaction bmm)

    key = jax.random.PRNGKey(0)
    k_x, k_g, k_w, k_b = jax.random.split(key, 4)

    x = jax.random.normal(k_x, (B, F_, E), dtype=jnp.float32)
    gnn_feature = jax.random.normal(k_g, (B, A), dtype=jnp.float32)

    # attention: Linear(embed_dim, attn_size) -> weight (A, E), bias (A,)
    bound = 1.0 / (E ** 0.5)
    w_att = jax.random.uniform(k_w, (A, E), minval=-bound, maxval=bound,
                               dtype=jnp.float32)
    b_att = jax.random.uniform(k_b, (A,), minval=-bound, maxval=bound,
                               dtype=jnp.float32)

    # TODO(synk): projection / fc Linear layers and dropout from __init__ are
    # unused / identity in eval-mode forward, so they are not implemented.

    out = afm_forward(gnn_feature, x, w_att, b_att)
    out = jax.block_until_ready(out)

    ref = afm_reference(gnn_feature, x, w_att, b_att)
    assert out.shape == (B, A + E), out.shape
    max_err = float(jnp.max(jnp.abs(out - ref)))
    assert jnp.allclose(out, ref, atol=1e-3, rtol=1e-3), (
        f"mismatch vs reference, max abs err={max_err}")

    print("KERNEL_OK")
</pallas_src>

<mosaic_0001>
module attributes {stable_mosaic.version = 11 : i64} {
  func.func @afm_kernel(%arg0: i32, %arg1: memref<8x32x128xf32, #tpu.memory_space<vmem>>, %arg2: memref<32x128xf32, #tpu.memory_space<vmem>>, %arg3: memref<32x32xf32, #tpu.memory_space<vmem>>, %arg4: memref<32x1xf32, #tpu.memory_space<vmem>>, %arg5: memref<64x128xf32, #tpu.memory_space<vmem>>) attributes {dimension_semantics = [#tpu.dimension_semantics<parallel>], iteration_bounds = array<i64: 2>, scalar_prefetch = 0 : i64, scratch_operands = 0 : i64, tpu.core_type = #tpu.core_type<tc>, window_params = [{transform_indices = @transform_0, window_bounds = array<i64: 8, 32, 128>}, {transform_indices = @transform_1, window_bounds = array<i64: 32, 128>}, {pipeline_mode = #tpu.pipeline_mode<synchronous>, transform_indices = @transform_2, window_bounds = array<i64: 32, 32>}, {pipeline_mode = #tpu.pipeline_mode<synchronous>, transform_indices = @transform_3, window_bounds = array<i64: 32, 1>}, {transform_indices = @transform_4, window_bounds = array<i64: 64, 128>}]} {
    %c0 = arith.constant 0 : index
    %c0_0 = arith.constant 0 : index
    %c0_1 = arith.constant 0 : index
    %0 = vector.load %arg1[%c0, %c0_0, %c0_1] : memref<8x32x128xf32, #tpu.memory_space<vmem>>, vector<1x32x128xf32>
    %1 = vector.shape_cast %0 : vector<1x32x128xf32> to vector<32x128xf32>
    %c1 = arith.constant 1 : index
    %c0_2 = arith.constant 0 : index
    %c0_3 = arith.constant 0 : index
    %2 = vector.load %arg1[%c1, %c0_2, %c0_3] : memref<8x32x128xf32, #tpu.memory_space<vmem>>, vector<1x32x128xf32>
    %3 = vector.shape_cast %2 : vector<1x32x128xf32> to vector<32x128xf32>
    %c2 = arith.constant 2 : index
    %c0_4 = arith.constant 0 : index
    %c0_5 = arith.constant 0 : index
    %4 = vector.load %arg1[%c2, %c0_4, %c0_5] : memref<8x32x128xf32, #tpu.memory_space<vmem>>, vector<1x32x128xf32>
    %5 = vector.shape_cast %4 : vector<1x32x128xf32> to vector<32x128xf32>
    %c3 = arith.constant 3 : index
    %c0_6 = arith.constant 0 : index
    %c0_7 = arith.constant 0 : index
    %6 = vector.load %arg1[%c3, %c0_6, %c0_7] : memref<8x32x128xf32, #tpu.memory_space<vmem>>, vector<1x32x128xf32>
    %7 = vector.shape_cast %6 : vector<1x32x128xf32> to vector<32x128xf32>
    %c4 = arith.constant 4 : index
    %c0_8 = arith.constant 0 : index
    %c0_9 = arith.constant 0 : index
    %8 = vector.load %arg1[%c4, %c0_8, %c0_9] : memref<8x32x128xf32, #tpu.memory_space<vmem>>, vector<1x32x128xf32>
    %9 = vector.shape_cast %8 : vector<1x32x128xf32> to vector<32x128xf32>
    %c5 = arith.constant 5 : index
    %c0_10 = arith.constant 0 : index
    %c0_11 = arith.constant 0 : index
    %10 = vector.load %arg1[%c5, %c0_10, %c0_11] : memref<8x32x128xf32, #tpu.memory_space<vmem>>, vector<1x32x128xf32>
    %11 = vector.shape_cast %10 : vector<1x32x128xf32> to vector<32x128xf32>
    %c6 = arith.constant 6 : index
    %c0_12 = arith.constant 0 : index
    %c0_13 = arith.constant 0 : index
    %12 = vector.load %arg1[%c6, %c0_12, %c0_13] : memref<8x32x128xf32, #tpu.memory_space<vmem>>, vector<1x32x128xf32>
    %13 = vector.shape_cast %12 : vector<1x32x128xf32> to vector<32x128xf32>
    %c7 = arith.constant 7 : index
    %c0_14 = arith.constant 0 : index
    %c0_15 = arith.constant 0 : index
    %14 = vector.load %arg1[%c7, %c0_14, %c0_15] : memref<8x32x128xf32, #tpu.memory_space<vmem>>, vector<1x32x128xf32>
    %15 = vector.shape_cast %14 : vector<1x32x128xf32> to vector<32x128xf32>
    %16 = arith.mulf %1, %3 : vector<32x128xf32>
    %17 = arith.mulf %1, %5 : vector<32x128xf32>
    %18 = arith.mulf %1, %7 : vector<32x128xf32>
    %19 = arith.mulf %1, %9 : vector<32x128xf32>
    %20 = arith.mulf %1, %11 : vector<32x128xf32>
    %21 = arith.mulf %1, %13 : vector<32x128xf32>
    %22 = arith.mulf %1, %15 : vector<32x128xf32>
    %23 = arith.mulf %3, %5 : vector<32x128xf32>
    %24 = arith.mulf %3, %7 : vector<32x128xf32>
    %25 = arith.mulf %3, %9 : vector<32x128xf32>
    %26 = arith.mulf %3, %11 : vector<32x128xf32>
    %27 = arith.mulf %3, %13 : vector<32x128xf32>
    %28 = arith.mulf %3, %15 : vector<32x128xf32>
    %29 = arith.mulf %5, %7 : vector<32x128xf32>
    %30 = arith.mulf %5, %9 : vector<32x128xf32>
    %31 = arith.mulf %5, %11 : vector<32x128xf32>
    %32 = arith.mulf %5, %13 : vector<32x128xf32>
    %33 = arith.mulf %5, %15 : vector<32x128xf32>
    %34 = arith.mulf %7, %9 : vector<32x128xf32>
    %35 = arith.mulf %7, %11 : vector<32x128xf32>
    %36 = arith.mulf %7, %13 : vector<32x128xf32>
    %37 = arith.mulf %7, %15 : vector<32x128xf32>
    %38 = arith.mulf %9, %11 : vector<32x128xf32>
    %39 = arith.mulf %9, %13 : vector<32x128xf32>
    %40 = arith.mulf %9, %15 : vector<32x128xf32>
    %41 = arith.mulf %11, %13 : vector<32x128xf32>
    %42 = arith.mulf %11, %15 : vector<32x128xf32>
    %43 = arith.mulf %13, %15 : vector<32x128xf32>
    %44 = tpu.concatenate %16, %17, %18, %19, %20, %21, %22, %23, %24, %25, %26, %27, %28, %29, %30, %31 in 1 : vector<32x128xf32>, vector<32x128xf32>, vector<32x128xf32>, vector<32x128xf32>, vector<32x128xf32>, vector<32x128xf32>, vector<32x128xf32>, vector<32x128xf32>, vector<32x128xf32>, vector<32x128xf32>, vector<32x128xf32>, vector<32x128xf32>, vector<32x128xf32>, vector<32x128xf32>, vector<32x128xf32>, vector<32x128xf32> -> vector<32x2048xf32>
    %45 = tpu.concatenate %32, %33, %34, %35, %36, %37, %38, %39, %40, %41, %42, %43 in 1 : vector<32x128xf32>, vector<32x128xf32>, vector<32x128xf32>, vector<32x128xf32>, vector<32x128xf32>, vector<32x128xf32>, vector<32x128xf32>, vector<32x128xf32>, vector<32x128xf32>, vector<32x128xf32>, vector<32x128xf32>, vector<32x128xf32> -> vector<32x1536xf32>
    %46 = tpu.concatenate %44, %45 in 1 : vector<32x2048xf32>, vector<32x1536xf32> -> vector<32x3584xf32>
    %c0_16 = arith.constant 0 : index
    %c0_17 = arith.constant 0 : index
    %47 = vector.load %arg3[%c0_16, %c0_17] : memref<32x32xf32, #tpu.memory_space<vmem>>, vector<32x32xf32>
    %cst = arith.constant dense<0.000000e+00> : vector<32x3584xf32>
    %48 = tpu.matmul %47, %46, %cst {dimension_numbers = #tpu.dot_dimension_numbers<[1], [0], [0], [1], [0, 0, 1, 1], [], []>} : vector<32x32xf32>, vector<32x3584xf32>, vector<32x3584xf32> -> vector<32x3584xf32>
    %c0_18 = arith.constant 0 : index
    %c0_19 = arith.constant 0 : index
    %49 = vector.load %arg4[%c0_18, %c0_19] : memref<32x1xf32, #tpu.memory_space<vmem>>, vector<32x1xf32>
    %50 = vector.broadcast %49 : vector<32x1xf32> to vector<32x3584xf32>
    %51 = arith.addf %48, %50 : vector<32x3584xf32>
    %cst_20 = arith.constant 0.000000e+00 : f32
    %52 = vector.broadcast %cst_20 : f32 to vector<32x3584xf32>
    %53 = arith.maximumf %51, %52 : vector<32x3584xf32>
    %c0_21 = arith.constant 0 : index
    %c0_22 = arith.constant 0 : index
    %54 = vector.load %arg2[%c0_21, %c0_22] : memref<32x128xf32, #tpu.memory_space<vmem>>, vector<32x128xf32>
    %55 = vector.extract_strided_slice %53 {offsets = [0, 0], sizes = [32, 128], strides = [1, 1]} : vector<32x3584xf32> to vector<32x128xf32>
    %56 = arith.mulf %55, %54 : vector<32x128xf32>
    %cst_23 = arith.constant dense<0.000000e+00> : vector<128xf32>
    %57 = vector.multi_reduction <add>, %56, %cst_23 [0] : vector<32x128xf32> to vector<128xf32>
    %58 = vector.shape_cast %57 : vector<128xf32> to vector<1x128xf32>
    %59 = vector.extract_strided_slice %53 {offsets = [0, 128], sizes = [32, 128], strides = [1, 1]} : vector<32x3584xf32> to vector<32x128xf32>
    %60 = arith.mulf %59, %54 : vector<32x128xf32>
    %cst_24 = arith.constant dense<0.000000e+00> : vector<128xf32>
    %61 = vector.multi_reduction <add>, %60, %cst_24 [0] : vector<32x128xf32> to vector<128xf32>
    %62 = vector.shape_cast %61 : vector<128xf32> to vector<1x128xf32>
    %63 = vector.extract_strided_slice %53 {offsets = [0, 256], sizes = [32, 128], strides = [1, 1]} : vector<32x3584xf32> to vector<32x128xf32>
    %64 = arith.mulf %63, %54 : vector<32x128xf32>
    %cst_25 = arith.constant dense<0.000000e+00> : vector<128xf32>
    %65 = vector.multi_reduction <add>, %64, %cst_25 [0] : vector<32x128xf32> to vector<128xf32>
    %66 = vector.shape_cast %65 : vector<128xf32> to vector<1x128xf32>
    %67 = vector.extract_strided_slice %53 {offsets = [0, 384], sizes = [32, 128], strides = [1, 1]} : vector<32x3584xf32> to vector<32x128xf32>
    %68 = arith.mulf %67, %54 : vector<32x128xf32>
    %cst_26 = arith.constant dense<0.000000e+00> : vector<128xf32>
    %69 = vector.multi_reduction <add>, %68, %cst_26 [0] : vector<32x128xf32> to vector<128xf32>
    %70 = vector.shape_cast %69 : vector<128xf32> to vector<1x128xf32>
    %71 = vector.extract_strided_slice %53 {offsets = [0, 512], sizes = [32, 128], strides = [1, 1]} : vector<32x3584xf32> to vector<32x128xf32>
    %72 = arith.mulf %71, %54 : vector<32x128xf32>
    %cst_27 = arith.constant dense<0.000000e+00> : vector<128xf32>
    %73 = vector.multi_reduction <add>, %72, %cst_27 [0] : vector<32x128xf32> to vector<128xf32>
    %74 = vector.shape_cast %73 : vector<128xf32> to vector<1x128xf32>
    %75 = vector.extract_strided_slice %53 {offsets = [0, 640], sizes = [32, 128], strides = [1, 1]} : vector<32x3584xf32> to vector<32x128xf32>
    %76 = arith.mulf %75, %54 : vector<32x128xf32>
    %cst_28 = arith.constant dense<0.000000e+00> : vector<128xf32>
    %77 = vector.multi_reduction <add>, %76, %cst_28 [0] : vector<32x128xf32> to vector<128xf32>
    %78 = vector.shape_cast %77 : vector<128xf32> to vector<1x128xf32>
    %79 = vector.extract_strided_slice %53 {offsets = [0, 768], sizes = [32, 128], strides = [1, 1]} : vector<32x3584xf32> to vector<32x128xf32>
    %80 = arith.mulf %79, %54 : vector<32x128xf32>
    %cst_29 = arith.constant dense<0.000000e+00> : vector<128xf32>
    %81 = vector.multi_reduction <add>, %80, %cst_29 [0] : vector<32x128xf32> to vector<128xf32>
    %82 = vector.shape_cast %81 : vector<128xf32> to vector<1x128xf32>
    %83 = vector.extract_strided_slice %53 {offsets = [0, 896], sizes = [32, 128], strides = [1, 1]} : vector<32x3584xf32> to vector<32x128xf32>
    %84 = arith.mulf %83, %54 : vector<32x128xf32>
    %cst_30 = arith.constant dense<0.000000e+00> : vector<128xf32>
    %85 = vector.multi_reduction <add>, %84, %cst_30 [0] : vector<32x128xf32> to vector<128xf32>
    %86 = vector.shape_cast %85 : vector<128xf32> to vector<1x128xf32>
    %87 = vector.extract_strided_slice %53 {offsets = [0, 1024], sizes = [32, 128], strides = [1, 1]} : vector<32x3584xf32> to vector<32x128xf32>
    %88 = arith.mulf %87, %54 : vector<32x128xf32>
    %cst_31 = arith.constant dense<0.000000e+00> : vector<128xf32>
    %89 = vector.multi_reduction <add>, %88, %cst_31 [0] : vector<32x128xf32> to vector<128xf32>
    %90 = vector.shape_cast %89 : vector<128xf32> to vector<1x128xf32>
    %91 = vector.extract_strided_slice %53 {offsets = [0, 1152], sizes = [32, 128], strides = [1, 1]} : vector<32x3584xf32> to vector<32x128xf32>
    %92 = arith.mulf %91, %54 : vector<32x128xf32>
    %cst_32 = arith.constant dense<0.000000e+00> : vector<128xf32>
    %93 = vector.multi_reduction <add>, %92, %cst_32 [0] : vector<32x128xf32> to vector<128xf32>
    %94 = vector.shape_cast %93 : vector<128xf32> to vector<1x128xf32>
    %95 = vector.extract_strided_slice %53 {offsets = [0, 1280], sizes = [32, 128], strides = [1, 1]} : vector<32x3584xf32> to vector<32x128xf32>
    %96 = arith.mulf %95, %54 : vector<32x128xf32>
    %cst_33 = arith.constant dense<0.000000e+00> : vector<128xf32>
    %97 = vector.multi_reduction <add>, %96, %cst_33 [0] : vector<32x128xf32> to vector<128xf32>
    %98 = vector.shape_cast %97 : vector<128xf32> to vector<1x128xf32>
    %99 = vector.extract_strided_slice %53 {offsets = [0, 1408], sizes = [32, 128], strides = [1, 1]} : vector<32x3584xf32> to vector<32x128xf32>
    %100 = arith.mulf %99, %54 : vector<32x128xf32>
    %cst_34 = arith.constant dense<0.000000e+00> : vector<128xf32>
    %101 = vector.multi_reduction <add>, %100, %cst_34 [0] : vector<32x128xf32> to vector<128xf32>
    %102 = vector.shape_cast %101 : vector<128xf32> to vector<1x128xf32>
    %103 = vector.extract_strided_slice %53 {offsets = [0, 1536], sizes = [32, 128], strides = [1, 1]} : vector<32x3584xf32> to vector<32x128xf32>
    %104 = arith.mulf %103, %54 : vector<32x128xf32>
    %cst_35 = arith.constant dense<0.000000e+00> : vector<128xf32>
    %105 = vector.multi_reduction <add>, %104, %cst_35 [0] : vector<32x128xf32> to vector<128xf32>
    %106 = vector.shape_cast %105 : vector<128xf32> to vector<1x128xf32>
    %107 = vector.extract_strided_slice %53 {offsets = [0, 1664], sizes = [32, 128], strides = [1, 1]} : vector<32x3584xf32> to vector<32x128xf32>
    %108 = arith.mulf %107, %54 : vector<32x128xf32>
    %cst_36 = arith.constant dense<0.000000e+00> : vector<128xf32>
    %109 = vector.multi_reduction <add>, %108, %cst_36 [0] : vector<32x128xf32> to vector<128xf32>
    %110 = vector.shape_cast %109 : vector<128xf32> to vector<1x128xf32>
    %111 = vector.extract_strided_slice %53 {offsets = [0, 1792], sizes = [32, 128], strides = [1, 1]} : vector<32x3584xf32> to vector<32x128xf32>
    %112 = arith.mulf %111, %54 : vector<32x128xf32>
    %cst_37 = arith.constant dense<0.000000e+00> : vector<128xf32>
    %113 = vector.multi_reduction <add>, %112, %cst_37 [0] : vector<32x128xf32> to vector<128xf32>
    %114 = vector.shape_cast %113 : vector<128xf32> to vector<1x128xf32>
    %115 = vector.extract_strided_slice %53 {offsets = [0, 1920], sizes = [32, 128], strides = [1, 1]} : vector<32x3584xf32> to vector<32x128xf32>
    %116 = arith.mulf %115, %54 : vector<32x128xf32>
    %cst_38 = arith.constant dense<0.000000e+00> : vector<128xf32>
    %117 = vector.multi_reduction <add>, %116, %cst_38 [0] : vector<32x128xf32> to vector<128xf32>
    %118 = vector.shape_cast %117 : vector<128xf32> to vector<1x128xf32>
    %119 = vector.extract_strided_slice %53 {offsets = [0, 2048], sizes = [32, 128], strides = [1, 1]} : vector<32x3584xf32> to vector<32x128xf32>
    %120 = arith.mulf %119, %54 : vector<32x128xf32>
    %cst_39 = arith.constant dense<0.000000e+00> : vector<128xf32>
    %121 = vector.multi_reduction <add>, %120, %cst_39 [0] : vector<32x128xf32> to vector<128xf32>
    %122 = vector.shape_cast %121 : vector<128xf32> to vector<1x128xf32>
    %123 = vector.extract_strided_slice %53 {offsets = [0, 2176], sizes = [32, 128], strides = [1, 1]} : vector<32x3584xf32> to vector<32x128xf32>
    %124 = arith.mulf %123, %54 : vector<32x128xf32>
    %cst_40 = arith.constant dense<0.000000e+00> : vector<128xf32>
    %125 = vector.multi_reduction <add>, %124, %cst_40 [0] : vector<32x128xf32> to vector<128xf32>
    %126 = vector.shape_cast %125 : vector<128xf32> to vector<1x128xf32>
    %127 = vector.extract_strided_slice %53 {offsets = [0, 2304], sizes = [32, 128], strides = [1, 1]} : vector<32x3584xf32> to vector<32x128xf32>
    %128 = arith.mulf %127, %54 : vector<32x128xf32>
    %cst_41 = arith.constant dense<0.000000e+00> : vector<128xf32>
    %129 = vector.multi_reduction <add>, %128, %cst_41 [0] : vector<32x128xf32> to vector<128xf32>
    %130 = vector.shape_cast %129 : vector<128xf32> to vector<1x128xf32>
    %131 = vector.extract_strided_slice %53 {offsets = [0, 2432], sizes = [32, 128], strides = [1, 1]} : vector<32x3584xf32> to vector<32x128xf32>
    %132 = arith.mulf %131, %54 : vector<32x128xf32>
    %cst_42 = arith.constant dense<0.000000e+00> : vector<128xf32>
    %133 = vector.multi_reduction <add>, %132, %cst_42 [0] : vector<32x128xf32> to vector<128xf32>
    %134 = vector.shape_cast %133 : vector<128xf32> to vector<1x128xf32>
    %135 = vector.extract_strided_slice %53 {offsets = [0, 2560], sizes = [32, 128], strides = [1, 1]} : vector<32x3584xf32> to vector<32x128xf32>
    %136 = arith.mulf %135, %54 : vector<32x128xf32>
    %cst_43 = arith.constant dense<0.000000e+00> : vector<128xf32>
    %137 = vector.multi_reduction <add>, %136, %cst_43 [0] : vector<32x128xf32> to vector<128xf32>
    %138 = vector.shape_cast %137 : vector<128xf32> to vector<1x128xf32>
    %139 = vector.extract_strided_slice %53 {offsets = [0, 2688], sizes = [32, 128], strides = [1, 1]} : vector<32x3584xf32> to vector<32x128xf32>
    %140 = arith.mulf %139, %54 : vector<32x128xf32>
    %cst_44 = arith.constant dense<0.000000e+00> : vector<128xf32>
    %141 = vector.multi_reduction <add>, %140, %cst_44 [0] : vector<32x128xf32> to vector<128xf32>
    %142 = vector.shape_cast %141 : vector<128xf32> to vector<1x128xf32>
    %143 = vector.extract_strided_slice %53 {offsets = [0, 2816], sizes = [32, 128], strides = [1, 1]} : vector<32x3584xf32> to vector<32x128xf32>
    %144 = arith.mulf %143, %54 : vector<32x128xf32>
    %cst_45 = arith.constant dense<0.000000e+00> : vector<128xf32>
    %145 = vector.multi_reduction <add>, %144, %cst_45 [0] : vector<32x128xf32> to vector<128xf32>
    %146 = vector.shape_cast %145 : vector<128xf32> to vector<1x128xf32>
    %147 = vector.extract_strided_slice %53 {offsets = [0, 2944], sizes = [32, 128], strides = [1, 1]} : vector<32x3584xf32> to vector<32x128xf32>
    %148 = arith.mulf %147, %54 : vector<32x128xf32>
    %cst_46 = arith.constant dense<0.000000e+00> : vector<128xf32>
    %149 = vector.multi_reduction <add>, %148, %cst_46 [0] : vector<32x128xf32> to vector<128xf32>
    %150 = vector.shape_cast %149 : vector<128xf32> to vector<1x128xf32>
    %151 = vector.extract_strided_slice %53 {offsets = [0, 3072], sizes = [32, 128], strides = [1, 1]} : vector<32x3584xf32> to vector<32x128xf32>
    %152 = arith.mulf %151, %54 : vector<32x128xf32>
    %cst_47 = arith.constant dense<0.000000e+00> : vector<128xf32>
    %153 = vector.multi_reduction <add>, %152, %cst_47 [0] : vector<32x128xf32> to vector<128xf32>
    %154 = vector.shape_cast %153 : vector<128xf32> to vector<1x128xf32>
    %155 = vector.extract_strided_slice %53 {offsets = [0, 3200], sizes = [32, 128], strides = [1, 1]} : vector<32x3584xf32> to vector<32x128xf32>
    %156 = arith.mulf %155, %54 : vector<32x128xf32>
    %cst_48 = arith.constant dense<0.000000e+00> : vector<128xf32>
    %157 = vector.multi_reduction <add>, %156, %cst_48 [0] : vector<32x128xf32> to vector<128xf32>
    %158 = vector.shape_cast %157 : vector<128xf32> to vector<1x128xf32>
    %159 = vector.extract_strided_slice %53 {offsets = [0, 3328], sizes = [32, 128], strides = [1, 1]} : vector<32x3584xf32> to vector<32x128xf32>
    %160 = arith.mulf %159, %54 : vector<32x128xf32>
    %cst_49 = arith.constant dense<0.000000e+00> : vector<128xf32>
    %161 = vector.multi_reduction <add>, %160, %cst_49 [0] : vector<32x128xf32> to vector<128xf32>
    %162 = vector.shape_cast %161 : vector<128xf32> to vector<1x128xf32>
    %163 = vector.extract_strided_slice %53 {offsets = [0, 3456], sizes = [32, 128], strides = [1, 1]} : vector<32x3584xf32> to vector<32x128xf32>
    %164 = arith.mulf %163, %54 : vector<32x128xf32>
    %cst_50 = arith.constant dense<0.000000e+00> : vector<128xf32>
    %165 = vector.multi_reduction <add>, %164, %cst_50 [0] : vector<32x128xf32> to vector<128xf32>
    %166 = vector.shape_cast %165 : vector<128xf32> to vector<1x128xf32>
    %167 = arith.maximumf %58, %62 : vector<1x128xf32>
    %168 = arith.maximumf %167, %66 : vector<1x128xf32>
    %169 = arith.maximumf %168, %70 : vector<1x128xf32>
    %170 = arith.maximumf %169, %74 : vector<1x128xf32>
    %171 = arith.maximumf %170, %78 : vector<1x128xf32>
    %172 = arith.maximumf %171, %82 : vector<1x128xf32>
    %173 = arith.maximumf %172, %86 : vector<1x128xf32>
    %174 = arith.maximumf %173, %90 : vector<1x128xf32>
    %175 = arith.maximumf %174, %94 : vector<1x128xf32>
    %176 = arith.maximumf %175, %98 : vector<1x128xf32>
    %177 = arith.maximumf %176, %102 : vector<1x128xf32>
    %178 = arith.maximumf %177, %106 : vector<1x128xf32>
    %179 = arith.maximumf %178, %110 : vector<1x128xf32>
    %180 = arith.maximumf %179, %114 : vector<1x128xf32>
    %181 = arith.maximumf %180, %118 : vector<1x128xf32>
    %182 = arith.maximumf %181, %122 : vector<1x128xf32>
    %183 = arith.maximumf %182, %126 : vector<1x128xf32>
    %184 = arith.maximumf %183, %130 : vector<1x128xf32>
    %185 = arith.maximumf %184, %134 : vector<1x128xf32>
    %186 = arith.maximumf %185, %138 : vector<1x128xf32>
    %187 = arith.maximumf %186, %142 : vector<1x128xf32>
    %188 = arith.maximumf %187, %146 : vector<1x128xf32>
    %189 = arith.maximumf %188, %150 : vector<1x128xf32>
    %190 = arith.maximumf %189, %154 : vector<1x128xf32>
    %191 = arith.maximumf %190, %158 : vector<1x128xf32>
    %192 = arith.maximumf %191, %162 : vector<1x128xf32>
    %193 = arith.maximumf %192, %166 : vector<1x128xf32>
    %194 = arith.subf %58, %193 : vector<1x128xf32>
    %195 = math.exp %194 : vector<1x128xf32>
    %196 = arith.subf %62, %193 : vector<1x128xf32>
    %197 = math.exp %196 : vector<1x128xf32>
    %198 = arith.subf %66, %193 : vector<1x128xf32>
    %199 = math.exp %198 : vector<1x128xf32>
    %200 = arith.subf %70, %193 : vector<1x128xf32>
    %201 = math.exp %200 : vector<1x128xf32>
    %202 = arith.subf %74, %193 : vector<1x128xf32>
    %203 = math.exp %202 : vector<1x128xf32>
    %204 = arith.subf %78, %193 : vector<1x128xf32>
    %205 = math.exp %204 : vector<1x128xf32>
    %206 = arith.subf %82, %193 : vector<1x128xf32>
    %207 = math.exp %206 : vector<1x128xf32>
    %208 = arith.subf %86, %193 : vector<1x128xf32>
    %209 = math.exp %208 : vector<1x128xf32>
    %210 = arith.subf %90, %193 : vector<1x128xf32>
    %211 = math.exp %210 : vector<1x128xf32>
    %212 = arith.subf %94, %193 : vector<1x128xf32>
    %213 = math.exp %212 : vector<1x128xf32>
    %214 = arith.subf %98, %193 : vector<1x128xf32>
    %215 = math.exp %214 : vector<1x128xf32>
    %216 = arith.subf %102, %193 : vector<1x128xf32>
    %217 = math.exp %216 : vector<1x128xf32>
    %218 = arith.subf %106, %193 : vector<1x128xf32>
    %219 = math.exp %218 : vector<1x128xf32>
    %220 = arith.subf %110, %193 : vector<1x128xf32>
    %221 = math.exp %220 : vector<1x128xf32>
    %222 = arith.subf %114, %193 : vector<1x128xf32>
    %223 = math.exp %222 : vector<1x128xf32>
    %224 = arith.subf %118, %193 : vector<1x128xf32>
    %225 = math.exp %224 : vector<1x128xf32>
    %226 = arith.subf %122, %193 : vector<1x128xf32>
    %227 = math.exp %226 : vector<1x128xf32>
    %228 = arith.subf %126, %193 : vector<1x128xf32>
    %229 = math.exp %228 : vector<1x128xf32>
    %230 = arith.subf %130, %193 : vector<1x128xf32>
    %231 = math.exp %230 : vector<1x128xf32>
    %232 = arith.subf %134, %193 : vector<1x128xf32>
    %233 = math.exp %232 : vector<1x128xf32>
    %234 = arith.subf %138, %193 : vector<1x128xf32>
    %235 = math.exp %234 : vector<1x128xf32>
    %236 = arith.subf %142, %193 : vector<1x128xf32>
    %237 = math.exp %236 : vector<1x128xf32>
    %238 = arith.subf %146, %193 : vector<1x128xf32>
    %239 = math.exp %238 : vector<1x128xf32>
    %240 = arith.subf %150, %193 : vector<1x128xf32>
    %241 = math.exp %240 : vector<1x128xf32>
    %242 = arith.subf %154, %193 : vector<1x128xf32>
    %243 = math.exp %242 : vector<1x128xf32>
    %244 = arith.subf %158, %193 : vector<1x128xf32>
    %245 = math.exp %244 : vector<1x128xf32>
    %246 = arith.subf %162, %193 : vector<1x128xf32>
    %247 = math.exp %246 : vector<1x128xf32>
    %248 = arith.subf %166, %193 : vector<1x128xf32>
    %249 = math.exp %248 : vector<1x128xf32>
    %250 = arith.addf %195, %197 : vector<1x128xf32>
    %251 = arith.addf %250, %199 : vector<1x128xf32>
    %252 = arith.addf %251, %201 : vector<1x128xf32>
    %253 = arith.addf %252, %203 : vector<1x128xf32>
    %254 = arith.addf %253, %205 : vector<1x128xf32>
    %255 = arith.addf %254, %207 : vector<1x128xf32>
    %256 = arith.addf %255, %209 : vector<1x128xf32>
    %257 = arith.addf %256, %211 : vector<1x128xf32>
    %258 = arith.addf %257, %213 : vector<1x128xf32>
    %259 = arith.addf %258, %215 : vector<1x128xf32>
    %260 = arith.addf %259, %217 : vector<1x128xf32>
    %261 = arith.addf %260, %219 : vector<1x128xf32>
    %262 = arith.addf %261, %221 : vector<1x128xf32>
    %263 = arith.addf %262, %223 : vector<1x128xf32>
    %264 = arith.addf %263, %225 : vector<1x128xf32>
    %265 = arith.addf %264, %227 : vector<1x128xf32>
    %266 = arith.addf %265, %229 : vector<1x128xf32>
    %267 = arith.addf %266, %231 : vector<1x128xf32>
    %268 = arith.addf %267, %233 : vector<1x128xf32>
    %269 = arith.addf %268, %235 : vector<1x128xf32>
    %270 = arith.addf %269, %237 : vector<1x128xf32>
    %271 = arith.addf %270, %239 : vector<1x128xf32>
    %272 = arith.addf %271, %241 : vector<1x128xf32>
    %273 = arith.addf %272, %243 : vector<1x128xf32>
    %274 = arith.addf %273, %245 : vector<1x128xf32>
    %275 = arith.addf %274, %247 : vector<1x128xf32>
    %276 = arith.addf %275, %249 : vector<1x128xf32>
    %277 = tpu.reciprocal %276 {approx = true} : vector<1x128xf32> -> vector<1x128xf32>
    %278 = arith.mulf %276, %277 : vector<1x128xf32>
    %cst_51 = arith.constant 2.000000e+00 : f32
    %279 = vector.broadcast %cst_51 : f32 to vector<1x128xf32>
    %280 = arith.subf %279, %278 : vector<1x128xf32>
    %281 = arith.mulf %277, %280 : vector<1x128xf32>
    %cst_52 = arith.constant 2.800000e+01 : f32
    %282 = vector.broadcast %cst_52 : f32 to vector<1x128xf32>
    %283 = arith.mulf %281, %282 : vector<1x128xf32>
    %284 = vector.extract_strided_slice %46 {offsets = [0, 0], sizes = [32, 128], strides = [1, 1]} : vector<32x3584xf32> to vector<32x128xf32>
    %285 = arith.mulf %195, %283 : vector<1x128xf32>
    %286 = vector.broadcast %285 : vector<1x128xf32> to vector<32x128xf32>
    %287 = arith.mulf %284, %286 : vector<32x128xf32>
    %288 = vector.extract_strided_slice %46 {offsets = [0, 128], sizes = [32, 128], strides = [1, 1]} : vector<32x3584xf32> to vector<32x128xf32>
    %289 = arith.mulf %197, %283 : vector<1x128xf32>
    %290 = vector.broadcast %289 : vector<1x128xf32> to vector<32x128xf32>
    %291 = arith.mulf %288, %290 : vector<32x128xf32>
    %292 = arith.addf %287, %291 : vector<32x128xf32>
    %293 = vector.extract_strided_slice %46 {offsets = [0, 256], sizes = [32, 128], strides = [1, 1]} : vector<32x3584xf32> to vector<32x128xf32>
    %294 = arith.mulf %199, %283 : vector<1x128xf32>
    %295 = vector.broadcast %294 : vector<1x128xf32> to vector<32x128xf32>
    %296 = arith.mulf %293, %295 : vector<32x128xf32>
    %297 = arith.addf %292, %296 : vector<32x128xf32>
    %298 = vector.extract_strided_slice %46 {offsets = [0, 384], sizes = [32, 128], strides = [1, 1]} : vector<32x3584xf32> to vector<32x128xf32>
    %299 = arith.mulf %201, %283 : vector<1x128xf32>
    %300 = vector.broadcast %299 : vector<1x128xf32> to vector<32x128xf32>
    %301 = arith.mulf %298, %300 : vector<32x128xf32>
    %302 = arith.addf %297, %301 : vector<32x128xf32>
    %303 = vector.extract_strided_slice %46 {offsets = [0, 512], sizes = [32, 128], strides = [1, 1]} : vector<32x3584xf32> to vector<32x128xf32>
    %304 = arith.mulf %203, %283 : vector<1x128xf32>
    %305 = vector.broadcast %304 : vector<1x128xf32> to vector<32x128xf32>
    %306 = arith.mulf %303, %305 : vector<32x128xf32>
    %307 = arith.addf %302, %306 : vector<32x128xf32>
    %308 = vector.extract_strided_slice %46 {offsets = [0, 640], sizes = [32, 128], strides = [1, 1]} : vector<32x3584xf32> to vector<32x128xf32>
    %309 = arith.mulf %205, %283 : vector<1x128xf32>
    %310 = vector.broadcast %309 : vector<1x128xf32> to vector<32x128xf32>
    %311 = arith.mulf %308, %310 : vector<32x128xf32>
    %312 = arith.addf %307, %311 : vector<32x128xf32>
    %313 = vector.extract_strided_slice %46 {offsets = [0, 768], sizes = [32, 128], strides = [1, 1]} : vector<32x3584xf32> to vector<32x128xf32>
    %314 = arith.mulf %207, %283 : vector<1x128xf32>
    %315 = vector.broadcast %314 : vector<1x128xf32> to vector<32x128xf32>
    %316 = arith.mulf %313, %315 : vector<32x128xf32>
    %317 = arith.addf %312, %316 : vector<32x128xf32>
    %318 = vector.extract_strided_slice %46 {offsets = [0, 896], sizes = [32, 128], strides = [1, 1]} : vector<32x3584xf32> to vector<32x128xf32>
    %319 = arith.mulf %209, %283 : vector<1x128xf32>
    %320 = vector.broadcast %319 : vector<1x128xf32> to vector<32x128xf32>
    %321 = arith.mulf %318, %320 : vector<32x128xf32>
    %322 = arith.addf %317, %321 : vector<32x128xf32>
    %323 = vector.extract_strided_slice %46 {offsets = [0, 1024], sizes = [32, 128], strides = [1, 1]} : vector<32x3584xf32> to vector<32x128xf32>
    %324 = arith.mulf %211, %283 : vector<1x128xf32>
    %325 = vector.broadcast %324 : vector<1x128xf32> to vector<32x128xf32>
    %326 = arith.mulf %323, %325 : vector<32x128xf32>
    %327 = arith.addf %322, %326 : vector<32x128xf32>
    %328 = vector.extract_strided_slice %46 {offsets = [0, 1152], sizes = [32, 128], strides = [1, 1]} : vector<32x3584xf32> to vector<32x128xf32>
    %329 = arith.mulf %213, %283 : vector<1x128xf32>
    %330 = vector.broadcast %329 : vector<1x128xf32> to vector<32x128xf32>
    %331 = arith.mulf %328, %330 : vector<32x128xf32>
    %332 = arith.addf %327, %331 : vector<32x128xf32>
    %333 = vector.extract_strided_slice %46 {offsets = [0, 1280], sizes = [32, 128], strides = [1, 1]} : vector<32x3584xf32> to vector<32x128xf32>
    %334 = arith.mulf %215, %283 : vector<1x128xf32>
    %335 = vector.broadcast %334 : vector<1x128xf32> to vector<32x128xf32>
    %336 = arith.mulf %333, %335 : vector<32x128xf32>
    %337 = arith.addf %332, %336 : vector<32x128xf32>
    %338 = vector.extract_strided_slice %46 {offsets = [0, 1408], sizes = [32, 128], strides = [1, 1]} : vector<32x3584xf32> to vector<32x128xf32>
    %339 = arith.mulf %217, %283 : vector<1x128xf32>
    %340 = vector.broadcast %339 : vector<1x128xf32> to vector<32x128xf32>
    %341 = arith.mulf %338, %340 : vector<32x128xf32>
    %342 = arith.addf %337, %341 : vector<32x128xf32>
    %343 = vector.extract_strided_slice %46 {offsets = [0, 1536], sizes = [32, 128], strides = [1, 1]} : vector<32x3584xf32> to vector<32x128xf32>
    %344 = arith.mulf %219, %283 : vector<1x128xf32>
    %345 = vector.broadcast %344 : vector<1x128xf32> to vector<32x128xf32>
    %346 = arith.mulf %343, %345 : vector<32x128xf32>
    %347 = arith.addf %342, %346 : vector<32x128xf32>
    %348 = vector.extract_strided_slice %46 {offsets = [0, 1664], sizes = [32, 128], strides = [1, 1]} : vector<32x3584xf32> to vector<32x128xf32>
    %349 = arith.mulf %221, %283 : vector<1x128xf32>
    %350 = vector.broadcast %349 : vector<1x128xf32> to vector<32x128xf32>
    %351 = arith.mulf %348, %350 : vector<32x128xf32>
    %352 = arith.addf %347, %351 : vector<32x128xf32>
    %353 = vector.extract_strided_slice %46 {offsets = [0, 1792], sizes = [32, 128], strides = [1, 1]} : vector<32x3584xf32> to vector<32x128xf32>
    %354 = arith.mulf %223, %283 : vector<1x128xf32>
    %355 = vector.broadcast %354 : vector<1x128xf32> to vector<32x128xf32>
    %356 = arith.mulf %353, %355 : vector<32x128xf32>
    %357 = arith.addf %352, %356 : vector<32x128xf32>
    %358 = vector.extract_strided_slice %46 {offsets = [0, 1920], sizes = [32, 128], strides = [1, 1]} : vector<32x3584xf32> to vector<32x128xf32>
    %359 = arith.mulf %225, %283 : vector<1x128xf32>
    %360 = vector.broadcast %359 : vector<1x128xf32> to vector<32x128xf32>
    %361 = arith.mulf %358, %360 : vector<32x128xf32>
    %362 = arith.addf %357, %361 : vector<32x128xf32>
    %363 = vector.extract_strided_slice %46 {offsets = [0, 2048], sizes = [32, 128], strides = [1, 1]} : vector<32x3584xf32> to vector<32x128xf32>
    %364 = arith.mulf %227, %283 : vector<1x128xf32>
    %365 = vector.broadcast %364 : vector<1x128xf32> to vector<32x128xf32>
    %366 = arith.mulf %363, %365 : vector<32x128xf32>
    %367 = arith.addf %362, %366 : vector<32x128xf32>
    %368 = vector.extract_strided_slice %46 {offsets = [0, 2176], sizes = [32, 128], strides = [1, 1]} : vector<32x3584xf32> to vector<32x128xf32>
    %369 = arith.mulf %229, %283 : vector<1x128xf32>
    %370 = vector.broadcast %369 : vector<1x128xf32> to vector<32x128xf32>
    %371 = arith.mulf %368, %370 : vector<32x128xf32>
    %372 = arith.addf %367, %371 : vector<32x128xf32>
    %373 = vector.extract_strided_slice %46 {offsets = [0, 2304], sizes = [32, 128], strides = [1, 1]} : vector<32x3584xf32> to vector<32x128xf32>
    %374 = arith.mulf %231, %283 : vector<1x128xf32>
    %375 = vector.broadcast %374 : vector<1x128xf32> to vector<32x128xf32>
    %376 = arith.mulf %373, %375 : vector<32x128xf32>
    %377 = arith.addf %372, %376 : vector<32x128xf32>
    %378 = vector.extract_strided_slice %46 {offsets = [0, 2432], sizes = [32, 128], strides = [1, 1]} : vector<32x3584xf32> to vector<32x128xf32>
    %379 = arith.mulf %233, %283 : vector<1x128xf32>
    %380 = vector.broadcast %379 : vector<1x128xf32> to vector<32x128xf32>
    %381 = arith.mulf %378, %380 : vector<32x128xf32>
    %382 = arith.addf %377, %381 : vector<32x128xf32>
    %383 = vector.extract_strided_slice %46 {offsets = [0, 2560], sizes = [32, 128], strides = [1, 1]} : vector<32x3584xf32> to vector<32x128xf32>
    %384 = arith.mulf %235, %283 : vector<1x128xf32>
    %385 = vector.broadcast %384 : vector<1x128xf32> to vector<32x128xf32>
    %386 = arith.mulf %383, %385 : vector<32x128xf32>
    %387 = arith.addf %382, %386 : vector<32x128xf32>
    %388 = vector.extract_strided_slice %46 {offsets = [0, 2688], sizes = [32, 128], strides = [1, 1]} : vector<32x3584xf32> to vector<32x128xf32>
    %389 = arith.mulf %237, %283 : vector<1x128xf32>
    %390 = vector.broadcast %389 : vector<1x128xf32> to vector<32x128xf32>
    %391 = arith.mulf %388, %390 : vector<32x128xf32>
    %392 = arith.addf %387, %391 : vector<32x128xf32>
    %393 = vector.extract_strided_slice %46 {offsets = [0, 2816], sizes = [32, 128], strides = [1, 1]} : vector<32x3584xf32> to vector<32x128xf32>
    %394 = arith.mulf %239, %283 : vector<1x128xf32>
    %395 = vector.broadcast %394 : vector<1x128xf32> to vector<32x128xf32>
    %396 = arith.mulf %393, %395 : vector<32x128xf32>
    %397 = arith.addf %392, %396 : vector<32x128xf32>
    %398 = vector.extract_strided_slice %46 {offsets = [0, 2944], sizes = [32, 128], strides = [1, 1]} : vector<32x3584xf32> to vector<32x128xf32>
    %399 = arith.mulf %241, %283 : vector<1x128xf32>
    %400 = vector.broadcast %399 : vector<1x128xf32> to vector<32x128xf32>
    %401 = arith.mulf %398, %400 : vector<32x128xf32>
    %402 = arith.addf %397, %401 : vector<32x128xf32>
    %403 = vector.extract_strided_slice %46 {offsets = [0, 3072], sizes = [32, 128], strides = [1, 1]} : vector<32x3584xf32> to vector<32x128xf32>
    %404 = arith.mulf %243, %283 : vector<1x128xf32>
    %405 = vector.broadcast %404 : vector<1x128xf32> to vector<32x128xf32>
    %406 = arith.mulf %403, %405 : vector<32x128xf32>
    %407 = arith.addf %402, %406 : vector<32x128xf32>
    %408 = vector.extract_strided_slice %46 {offsets = [0, 3200], sizes = [32, 128], strides = [1, 1]} : vector<32x3584xf32> to vector<32x128xf32>
    %409 = arith.mulf %245, %283 : vector<1x128xf32>
    %410 = vector.broadcast %409 : vector<1x128xf32> to vector<32x128xf32>
    %411 = arith.mulf %408, %410 : vector<32x128xf32>
    %412 = arith.addf %407, %411 : vector<32x128xf32>
    %413 = vector.extract_strided_slice %46 {offsets = [0, 3328], sizes = [32, 128], strides = [1, 1]} : vector<32x3584xf32> to vector<32x128xf32>
    %414 = arith.mulf %247, %283 : vector<1x128xf32>
    %415 = vector.broadcast %414 : vector<1x128xf32> to vector<32x128xf32>
    %416 = arith.mulf %413, %415 : vector<32x128xf32>
    %417 = arith.addf %412, %416 : vector<32x128xf32>
    %418 = vector.extract_strided_slice %46 {offsets = [0, 3456], sizes = [32, 128], strides = [1, 1]} : vector<32x3584xf32> to vector<32x128xf32>
    %419 = arith.mulf %249, %283 : vector<1x128xf32>
    %420 = vector.broadcast %419 : vector<1x128xf32> to vector<32x128xf32>
    %421 = arith.mulf %418, %420 : vector<32x128xf32>
    %422 = arith.addf %417, %421 : vector<32x128xf32>
    %c0_53 = arith.constant 0 : index
    %c0_54 = arith.constant 0 : index
    %423 = vector.load %arg5[%c0_53, %c0_54] : memref<64x128xf32, #tpu.memory_space<vmem>>, vector<32x128xf32>
    tpu.vector_store %arg5[%c0_53, %c0_54], %54 {strides = array<i32>} : memref<64x128xf32, #tpu.memory_space<vmem>>, vector<32x128xf32>,
    %c32 = arith.constant 32 : index
    %c0_55 = arith.constant 0 : index
    %424 = vector.load %arg5[%c32, %c0_55] : memref<64x128xf32, #tpu.memory_space<vmem>>, vector<32x128xf32>
    tpu.vector_store %arg5[%c32, %c0_55], %422 {strides = array<i32>} : memref<64x128xf32, #tpu.memory_space<vmem>>, vector<32x128xf32>,
    return
  }
  func.func @transform_0(%arg0: i32) -> (i32, i32, i32) {
    %c0_i32 = arith.constant 0 : i32
    %c0_i32_0 = arith.constant 0 : i32
    %c0_i32_1 = arith.constant 0 : i32
    return %c0_i32, %c0_i32_0, %arg0 : i32, i32, i32
  }
  func.func @transform_1(%arg0: i32) -> (i32, i32) {
    %c0_i32 = arith.constant 0 : i32
    %c0_i32_0 = arith.constant 0 : i32
    return %c0_i32, %arg0 : i32, i32
  }
  func.func @transform_2(%arg0: i32) -> (i32, i32) {
    %c0_i32 = arith.constant 0 : i32
    %c0_i32_0 = arith.constant 0 : i32
    %c0_i32_1 = arith.constant 0 : i32
    return %c0_i32, %c0_i32_0 : i32, i32
  }
  func.func @transform_3(%arg0: i32) -> (i32, i32) {
    %c0_i32 = arith.constant 0 : i32
    %c0_i32_0 = arith.constant 0 : i32
    %c0_i32_1 = arith.constant 0 : i32
    return %c0_i32, %c0_i32_0 : i32, i32
  }
  func.func @transform_4(%arg0: i32) -> (i32, i32) {
    %c0_i32 = arith.constant 0 : i32
    %c0_i32_0 = arith.constant 0 : i32
    return %c0_i32, %arg0 : i32, i32
  }
}

</mosaic_0001>

<llo_original>
// kernel: tpu_custom_call.1
$region0: #{tpu_custom_call.1}
  #allocation0 [shape = 'u32[]', space=smem, size = 0x4, offset = 0x4, fixed_abs, tag = 'smem constant byte address 0x4 - core index']
  #allocation1 [shape = 'u32[72,128]{1,0:T(1,128)}', space=vmem, size = 0x9000, scoped, tag = 'internal scratch']
  %s0 = inlined_call_operand.hbm [shape: f32[8,32,256], index: 0, kind: input, shape index: {}]
  %s1 = inlined_call_operand.hbm [shape: f32[32,256], index: 1, kind: input, shape index: {}]
  %s2 = inlined_call_operand.vmem [shape: f32[32,32], index: 2, kind: input, shape index: {}]
  %s3 = inlined_call_operand.vmem [shape: f32[32,1], index: 3, kind: input, shape index: {}]
  %s4 = inlined_call_operand.hbm [shape: f32[64,256], index: 4, kind: output, shape index: {}]
  %s5 = sld [smem:[#allocation0]]
  $region57: #{tpu_custom_call.1} parent=0
    _
  %s7 = ssub.s32 1, %s5
  %s8 = scalar_select 0, %s7, %s5
  $region1: #{tpu_custom_call.1} parent=0
    #allocation2 [shape = 'u8[262144]{0}', space=vmem, size = 0x40000, scoped, tag = 'input window, operand 0']
    #allocation3 [shape = 's32[2]{0}', space=sflag, size = 0x8, scoped, tag = 'scoped memory for tpu_custom_call.1']
    #allocation4 [shape = 's32[2]{0}', space=sflag, size = 0x8, scoped, tag = 'scoped memory for tpu_custom_call.1']
    #allocation5 [shape = 'u8[32768]{0}', space=vmem, size = 0x8000, scoped, tag = 'input window, operand 1']
    #allocation6 [shape = 's32[2]{0}', space=sflag, size = 0x8, scoped, tag = 'scoped memory for tpu_custom_call.1']
    #allocation7 [shape = 'u8[65536]{0}', space=vmem, size = 0x10000, scoped, tag = 'output window, operand 0']
    %9 = vsyncpa [#allocation3], 0
    %s10 = scalar_lea.sflag [#allocation3], 1
    %11 = vsyncpa %s10, 0
    %12 = vsyncpa [#allocation6], 0
    %s13 = scalar_lea.sflag [#allocation6], 1
    %14 = vsyncpa %s13, 0
    %15 = vsyncpa [#allocation4], 0
    %s16 = scalar_lea.sflag [#allocation4], 1
    %17 = vsyncpa %s16, 0
    loop: start=0, step=1, limit=4
    $region2: #{tpu_custom_call.1} parent=1 // loop_pre_header
      _
    $region3: #{tpu_custom_call.1} parent=1 // loop_header
      %s19 = sphi 0, %s23
      %p20 = scmp.ge.s32.totalorder %s19, 4
      %s29 = sphi 0, %s31
      %s32 = sphi 0, %s29
      %s33 = sphi 0, %s32
      %s49 = sphi 0, %s33
      %s55 = sphi 0, %s57
      %s58 = sphi 0, %s55
      %s59 = sphi 0, %s58
      %s75 = sphi 0, %s59
      %s79 = sphi 0, %s79
      %s81 = sphi 0, %s79
      %s82 = sphi 0, %s81
      %s96 = sphi 0, %s82
      %s100 = sphi 0, %s100
      %s102 = sphi 0, %s100
      %s103 = sphi 0, %s102
      %s117 = sphi 0, %s103
      %s123 = sphi 0, %s125
      %s126 = sphi 0, %s123
      %s127 = sphi 0, %s126
      %s143 = sphi 0, %s127
    $region4: #{tpu_custom_call.1} parent=1 // loop_header_branch
      %22 = sbr.rel (%p20) target = $region8
    $region5: #{tpu_custom_call.1} parent=1 // loop_body
      %s24 = ssub.s32 %s19, 1
      %s25 = ssub.s32 %s19, 2
      %s26 = sadd.s32 %s19, 1
      %s27 = ssub.s32 %s19, %s26
      %p28 = scmp.eq.s32.totalorder %s27, 0
      %s30 = sadd.s32 %s29, 1
      %s31 = scalar_select %p28, %s29, %s30
      %p34 = pneg %p28
      %p35 = scmp.eq.s32.totalorder %s19, 1
      %p36 = por %p34, %p35
      %p37 = scmp.ne.s32.totalorder %s29, %s32
      %p38 = scmp.eq.s32.totalorder %s19, 0
      %p39 = por %p37, %p38
      %p40 = scmp.ne.s32.totalorder %s29, %s32
      %p41 = scmp.eq.s32.totalorder %s24, 1
      %p42 = por %p40, %p41
      %p43 = scmp.ne.s32.totalorder %s32, %s33
      %p44 = scmp.eq.s32.totalorder %s24, 0
      %p45 = por %p43, %p44
      %p46 = scmp.ne.s32.totalorder %s32, %s33
      %p47 = scmp.eq.s32.totalorder %s25, 1
      %p48 = por %p46, %p47
      %p50 = scmp.ne.s32.totalorder %s33, %s49
      %p51 = scmp.eq.s32.totalorder %s25, 0
      %p52 = por %p50, %p51
      %s53 = ssub.s32 %s19, %s26
      %p54 = scmp.eq.s32.totalorder %s53, 0
      %s56 = sadd.s32 %s55, 1
      %s57 = scalar_select %p54, %s55, %s56
      %p60 = pneg %p54
      %p61 = scmp.eq.s32.totalorder %s19, 1
      %p62 = por %p60, %p61
      %p63 = scmp.ne.s32.totalorder %s55, %s58
      %p64 = scmp.eq.s32.totalorder %s19, 0
      %p65 = por %p63, %p64
      %p66 = scmp.ne.s32.totalorder %s55, %s58
      %p67 = scmp.eq.s32.totalorder %s24, 1
      %p68 = por %p66, %p67
      %p69 = scmp.ne.s32.totalorder %s58, %s59
      %p70 = scmp.eq.s32.totalorder %s24, 0
      %p71 = por %p69, %p70
      %p72 = scmp.ne.s32.totalorder %s58, %s59
      %p73 = scmp.eq.s32.totalorder %s25, 1
      %p74 = por %p72, %p73
      %p76 = scmp.ne.s32.totalorder %s59, %s75
      %p77 = scmp.eq.s32.totalorder %s25, 0
      %p78 = por %p76, %p77
      %s80 = sadd.s32 %s79, 1
      %p83 = scmp.eq.s32.totalorder %s19, 1
      %p84 = scmp.ne.s32.totalorder %s79, %s81
      %p85 = scmp.eq.s32.totalorder %s19, 0
      %p86 = por %p84, %p85
      %p87 = scmp.ne.s32.totalorder %s79, %s81
      %p88 = scmp.eq.s32.totalorder %s24, 1
      %p89 = por %p87, %p88
      %p90 = scmp.ne.s32.totalorder %s81, %s82
      %p91 = scmp.eq.s32.totalorder %s24, 0
      %p92 = por %p90, %p91
      %p93 = scmp.ne.s32.totalorder %s81, %s82
      %p94 = scmp.eq.s32.totalorder %s25, 1
      %p95 = por %p93, %p94
      %p97 = scmp.ne.s32.totalorder %s82, %s96
      %p98 = scmp.eq.s32.totalorder %s25, 0
      %p99 = por %p97, %p98
      %s101 = sadd.s32 %s100, 1
      %p104 = scmp.eq.s32.totalorder %s19, 1
      %p105 = scmp.ne.s32.totalorder %s100, %s102
      %p106 = scmp.eq.s32.totalorder %s19, 0
      %p107 = por %p105, %p106
      %p108 = scmp.ne.s32.totalorder %s100, %s102
      %p109 = scmp.eq.s32.totalorder %s24, 1
      %p110 = por %p108, %p109
      %p111 = scmp.ne.s32.totalorder %s102, %s103
      %p112 = scmp.eq.s32.totalorder %s24, 0
      %p113 = por %p111, %p112
      %p114 = scmp.ne.s32.totalorder %s102, %s103
      %p115 = scmp.eq.s32.totalorder %s25, 1
      %p116 = por %p114, %p115
      %p118 = scmp.ne.s32.totalorder %s103, %s117
      %p119 = scmp.eq.s32.totalorder %s25, 0
      %p120 = por %p118, %p119
      %s121 = ssub.s32 %s19, %s26
      %p122 = scmp.eq.s32.totalorder %s121, 0
      %s124 = sadd.s32 %s123, 1
      %s125 = scalar_select %p122, %s123, %s124
      %p128 = pneg %p122
      %p129 = scmp.eq.s32.totalorder %s19, 1
      %p130 = por %p128, %p129
      %p131 = scmp.ne.s32.totalorder %s123, %s126
      %p132 = scmp.eq.s32.totalorder %s19, 0
      %p133 = por %p131, %p132
      %p134 = scmp.ne.s32.totalorder %s123, %s126
      %p135 = scmp.eq.s32.totalorder %s24, 1
      %p136 = por %p134, %p135
      %p137 = scmp.ne.s32.totalorder %s126, %s127
      %p138 = scmp.eq.s32.totalorder %s24, 0
      %p139 = por %p137, %p138
      %p140 = scmp.ne.s32.totalorder %s126, %s127
      %p141 = scmp.eq.s32.totalorder %s25, 1
      %p142 = por %p140, %p141
      %p144 = scmp.ne.s32.totalorder %s127, %s143
      %p145 = scmp.eq.s32.totalorder %s25, 0
      %p146 = por %p144, %p145
      %p147 = scmp.le.s32.totalorder 1, %s19
      %p148 = scmp.lt.s32.totalorder %s19, 3
      %p149 = pnand %p147, %p148
      %p150 = pneg %p149
      // Predicated region
      $region9: #{tpu_custom_call.1} parent=5 // pred_check
        _
      $region10: #{tpu_custom_call.1} parent=5 // pred_check_branch
        %152 = sbr.rel (%p149) target = $region12
      $region11: #{tpu_custom_call.1} parent=5 // pred_region
        %s153 = ssub.s32 %s19, 1
        // Predicated region
        $region13: #{tpu_custom_call.1} parent=11 // pred_check
          %p154 = pneg %p92
        $region14: #{tpu_custom_call.1} parent=11 // pred_check_branch
          %156 = sbr.rel (%p154) target = $region16
        $region15: #{tpu_custom_call.1} parent=11 // pred_region
          _
        $region16: #{tpu_custom_call.1} parent=11 // pred_fallthru
          _
        // Predicated region
        $region17: #{tpu_custom_call.1} parent=11 // pred_check
          %p157 = pneg %p113
        $region18: #{tpu_custom_call.1} parent=11 // pred_check_branch
          %159 = sbr.rel (%p157) target = $region20
        $region19: #{tpu_custom_call.1} parent=11 // pred_region
          _
        $region20: #{tpu_custom_call.1} parent=11 // pred_fallthru
          _
      $region12: #{tpu_custom_call.1} parent=5 // pred_fallthru
        _
      %p160 = scmp.lt.s32.totalorder %s19, 2
      // Predicated region
      $region21: #{tpu_custom_call.1} parent=5 // pred_check
        %p161 = pneg %p160
      $region22: #{tpu_custom_call.1} parent=5 // pred_check_branch
        %163 = sbr.rel (%p161) target = $region24
      $region23: #{tpu_custom_call.1} parent=5 // pred_region
        // Predicated region
        $region25: #{tpu_custom_call.1} parent=23 // pred_check
          %p164 = pneg %p39
        $region26: #{tpu_custom_call.1} parent=23 // pred_check_branch
          %166 = sbr.rel (%p164) target = $region28
        $region27: #{tpu_custom_call.1} parent=23 // pred_region
          %s167 = sand.u32 %s29, 1
          %s168 = scalar_lea.sflag [#allocation3], %s167
          %s169 = sand.u32 %s29, 1
          %s170 = smul.addr %s169, 256
          %s171 = scalar_lea.vmem [#allocation2], %s170
          %173 = vsyncadd %s168, 0
          %s174 = smul.addr %s19, 8
          %s175 = scalar_lea.hbm %s0, %s174
          %s176 = sshll.u32 %s175, 4
          %s177 = int_to_ptr.hbm [resolvable:$true] %s176
          %s178 = sshll.u32 %s171, 4
          %s179 = int_to_ptr.vmem [resolvable:$true] %s178
          %184 = dma.hbm_to_vmem [thread:$0]  %s177, 4096, %s179, %s168, 256, 128, 8
        $region28: #{tpu_custom_call.1} parent=23 // pred_fallthru
          _
        // Predicated region
        $region29: #{tpu_custom_call.1} parent=23 // pred_check
          %p185 = pneg %p65
        $region30: #{tpu_custom_call.1} parent=23 // pred_check_branch
          %187 = sbr.rel (%p185) target = $region32
        $region31: #{tpu_custom_call.1} parent=23 // pred_region
          %s188 = sand.u32 %s55, 1
          %s189 = scalar_lea.sflag [#allocation6], %s188
          %s190 = sand.u32 %s55, 1
          %s191 = smul.addr %s190, 32
          %s192 = scalar_lea.vmem [#allocation5], %s191
          %194 = vsyncadd %s189, 0
          %s195 = smul.addr %s19, 8
          %s196 = scalar_lea.hbm %s1, %s195
          %s197 = sshll.u32 %s196, 4
          %s198 = int_to_ptr.hbm [resolvable:$true] %s197
          %s199 = sshll.u32 %s192, 4
          %s200 = int_to_ptr.vmem [resolvable:$true] %s199
          %205 = dma.hbm_to_vmem [thread:$0]  %s198, 512, %s200, %s189, 256, 128, 8
        $region32: #{tpu_custom_call.1} parent=23 // pred_fallthru
          _
      $region24: #{tpu_custom_call.1} parent=5 // pred_fallthru
        _
      %p206 = scmp.le.s32.totalorder 1, %s19
      %p207 = scmp.lt.s32.totalorder %s19, 3
      %p208 = pnand %p206, %p207
      %p209 = pneg %p208
      // Predicated region
      $region33: #{tpu_custom_call.1} parent=5 // pred_check
        _
      $region34: #{tpu_custom_call.1} parent=5 // pred_check_branch
        %211 = sbr.rel (%p208) target = $region36
      $region35: #{tpu_custom_call.1} parent=5 // pred_region
        %s212 = ssub.s32 %s19, 1
        %s213 = sand.u32 %s32, 1
        %s214 = scalar_lea.sflag [#allocation3], %s213
        %s215 = sand.u32 %s32, 1
        %s216 = smul.addr %s215, 256
        %s217 = scalar_lea.vmem [#allocation2], %s216
        // Predicated region
        $region37: #{tpu_custom_call.1} parent=35 // pred_check
          %p218 = pneg %p45
        $region38: #{tpu_custom_call.1} parent=35 // pred_check_branch
          %220 = sbr.rel (%p218) target = $region40
        $region39: #{tpu_custom_call.1} parent=35 // pred_region
          %222 = dma.done %s214, 4096
        $region40: #{tpu_custom_call.1} parent=35 // pred_fallthru
          _
        %s223 = sand.u32 %s58, 1
        %s224 = scalar_lea.sflag [#allocation6], %s223
        %s225 = sand.u32 %s58, 1
        %s226 = smul.addr %s225, 32
        %s227 = scalar_lea.vmem [#allocation5], %s226
        // Predicated region
        $region41: #{tpu_custom_call.1} parent=35 // pred_check
          %p228 = pneg %p71
        $region42: #{tpu_custom_call.1} parent=35 // pred_check_branch
          %230 = sbr.rel (%p228) target = $region44
        $region43: #{tpu_custom_call.1} parent=35 // pred_region
          %232 = dma.done %s224, 512
        $region44: #{tpu_custom_call.1} parent=35 // pred_fallthru
          _
        %s233 = sand.u32 %s32, 1
        %s234 = scalar_lea.sflag [#allocation3], %s233
        %s235 = sand.u32 %s32, 1
        %s236 = smul.addr %s235, 256
        %s237 = scalar_lea.vmem [#allocation2], %s236
        %p238 = pneg %p45
        %p239 = pneg %p42
        %s240 = sand.u32 %s58, 1
        %s241 = scalar_lea.sflag [#allocation6], %s240
        %s242 = sand.u32 %s58, 1
        %s243 = smul.addr %s242, 32
        %s244 = scalar_lea.vmem [#allocation5], %s243
        %p245 = pneg %p71
        %p246 = pneg %p68
        %p247 = pneg %p92
        %p248 = pneg %p89
        %p249 = pneg %p113
        %p250 = pneg %p110
        %p251 = pneg %p139
        %p252 = pneg %p136
        %s253 = sand.u32 %s126, 1
        %s254 = scalar_lea.sflag [#allocation4], %s253
        %s255 = sand.u32 %s126, 1
        %s256 = smul.addr %s255, 64
        %s257 = scalar_lea.vmem [#allocation7], %s256
        %v258 = vld [vmem:[%s217] sm:$0xff]
        %v259 = vld [vmem:[%s217 + $0x8] sm:$0xff]
        %v260 = vld [vmem:[%s217 + $0x10] sm:$0xff]
        %v261 = vld [vmem:[%s217 + $0x18] sm:$0xff]
        %s262 = scalar_lea.vmem %s217, 32 [#allocation2]
        %v263 = vld [vmem:[%s262] sm:$0xff]
        %v264 = vld [vmem:[%s262 + $0x8] sm:$0xff]
        %v265 = vld [vmem:[%s262 + $0x10] sm:$0xff]
        %v266 = vld [vmem:[%s262 + $0x18] sm:$0xff]
        %s267 = scalar_lea.vmem %s217, 64 [#allocation2]
        %v268 = vld [vmem:[%s267] sm:$0xff]
        %v269 = vld [vmem:[%s267 + $0x8] sm:$0xff]
        %v270 = vld [vmem:[%s267 + $0x10] sm:$0xff]
        %v271 = vld [vmem:[%s267 + $0x18] sm:$0xff]
        %s272 = scalar_lea.vmem %s217, 96 [#allocation2]
        %v273 = vld [vmem:[%s272] sm:$0xff]
        %v274 = vld [vmem:[%s272 + $0x8] sm:$0xff]
        %v275 = vld [vmem:[%s272 + $0x10] sm:$0xff]
        %v276 = vld [vmem:[%s272 + $0x18] sm:$0xff]
        %s277 = scalar_lea.vmem %s217, 128 [#allocation2]
        %v278 = vld [vmem:[%s277] sm:$0xff]
        %v279 = vld [vmem:[%s277 + $0x8] sm:$0xff]
        %v280 = vld [vmem:[%s277 + $0x10] sm:$0xff]
        %v281 = vld [vmem:[%s277 + $0x18] sm:$0xff]
        %s282 = scalar_lea.vmem %s217, 160 [#allocation2]
        %v283 = vld [vmem:[%s282] sm:$0xff]
        %v284 = vld [vmem:[%s282 + $0x8] sm:$0xff]
        %v285 = vld [vmem:[%s282 + $0x10] sm:$0xff]
        %v286 = vld [vmem:[%s282 + $0x18] sm:$0xff]
        %s287 = scalar_lea.vmem %s217, 192 [#allocation2]
        %v288 = vld [vmem:[%s287] sm:$0xff]
        %v289 = vld [vmem:[%s287 + $0x8] sm:$0xff]
        %v290 = vld [vmem:[%s287 + $0x10] sm:$0xff]
        %v291 = vld [vmem:[%s287 + $0x18] sm:$0xff]
        %s292 = scalar_lea.vmem %s217, 224 [#allocation2]
        %v293 = vld [vmem:[%s292] sm:$0xff]
        %v294 = vld [vmem:[%s292 + $0x8] sm:$0xff]
        %v295 = vld [vmem:[%s292 + $0x10] sm:$0xff]
        %v296 = vld [vmem:[%s292 + $0x18] sm:$0xff]
        %v297 = vmul.f32 %v258, %v263
        %v298 = vmul.f32 %v259, %v264
        %v299 = vmul.f32 %v260, %v265
        %v300 = vmul.f32 %v261, %v266
        %v301 = vmul.f32 %v258, %v268
        %v302 = vmul.f32 %v259, %v269
        %v303 = vmul.f32 %v260, %v270
        %v304 = vmul.f32 %v261, %v271
        %v305 = vmul.f32 %v258, %v273
        %v306 = vmul.f32 %v259, %v274
        %v307 = vmul.f32 %v260, %v275
        %v308 = vmul.f32 %v261, %v276
        %v309 = vmul.f32 %v258, %v278
        %v310 = vmul.f32 %v259, %v279
        %v311 = vmul.f32 %v260, %v280
        %v312 = vmul.f32 %v261, %v281
        %v313 = vmul.f32 %v258, %v283
        %v314 = vmul.f32 %v259, %v284
        %v315 = vmul.f32 %v260, %v285
        %v316 = vmul.f32 %v261, %v286
        %v317 = vmul.f32 %v258, %v288
        %v318 = vmul.f32 %v259, %v289
        %v319 = vmul.f32 %v260, %v290
        %v320 = vmul.f32 %v261, %v291
        %v321 = vmul.f32 %v258, %v293
        %v322 = vmul.f32 %v259, %v294
        %v323 = vmul.f32 %v260, %v295
        %v324 = vmul.f32 %v261, %v296
        %v325 = vmul.f32 %v263, %v268
        %v326 = vmul.f32 %v264, %v269
        %v327 = vmul.f32 %v265, %v270
        %v328 = vmul.f32 %v266, %v271
        %v329 = vmul.f32 %v263, %v273
        %v330 = vmul.f32 %v264, %v274
        %v331 = vmul.f32 %v265, %v275
        %v332 = vmul.f32 %v266, %v276
        %v333 = vmul.f32 %v263, %v278
        %v334 = vmul.f32 %v264, %v279
        %v335 = vmul.f32 %v265, %v280
        %v336 = vmul.f32 %v266, %v281
        %v337 = vmul.f32 %v263, %v283
        %v338 = vmul.f32 %v264, %v284
        %v339 = vmul.f32 %v265, %v285
        %v340 = vmul.f32 %v266, %v286
        %v341 = vmul.f32 %v263, %v288
        %v342 = vmul.f32 %v264, %v289
        %v343 = vmul.f32 %v265, %v290
        %v344 = vmul.f32 %v266, %v291
        %v345 = vmul.f32 %v263, %v293
        %v346 = vmul.f32 %v264, %v294
        %v347 = vmul.f32 %v265, %v295
        %v348 = vmul.f32 %v266, %v296
        %v349 = vmul.f32 %v268, %v273
        %v350 = vmul.f32 %v269, %v274
        %v351 = vmul.f32 %v270, %v275
        %v352 = vmul.f32 %v271, %v276
        %v353 = vmul.f32 %v268, %v278
        %v354 = vmul.f32 %v269, %v279
        %v355 = vmul.f32 %v270, %v280
        %v356 = vmul.f32 %v271, %v281
        %v357 = vmul.f32 %v268, %v283
        %v358 = vmul.f32 %v269, %v284
        %v359 = vmul.f32 %v270, %v285
        %v360 = vmul.f32 %v271, %v286
        %v361 = vmul.f32 %v268, %v288
        %v362 = vmul.f32 %v269, %v289
        %v363 = vmul.f32 %v270, %v290
        %v364 = vmul.f32 %v271, %v291
        %v365 = vmul.f32 %v268, %v293
        %v366 = vmul.f32 %v269, %v294
        %v367 = vmul.f32 %v270, %v295
        %v368 = vmul.f32 %v271, %v296
        %v369 = vmul.f32 %v273, %v278
        %v370 = vmul.f32 %v274, %v279
        %v371 = vmul.f32 %v275, %v280
        %v372 = vmul.f32 %v276, %v281
        %v373 = vmul.f32 %v273, %v283
        %v374 = vmul.f32 %v274, %v284
        %v375 = vmul.f32 %v275, %v285
        %v376 = vmul.f32 %v276, %v286
        %v377 = vmul.f32 %v273, %v288
        %v378 = vmul.f32 %v274, %v289
        %v379 = vmul.f32 %v275, %v290
        %v380 = vmul.f32 %v276, %v291
        %v381 = vmul.f32 %v273, %v293
        %v382 = vmul.f32 %v274, %v294
        %v383 = vmul.f32 %v275, %v295
        %v384 = vmul.f32 %v276, %v296
        %v385 = vmul.f32 %v278, %v283
        %v386 = vmul.f32 %v279, %v284
        %v387 = vmul.f32 %v280, %v285
        %v388 = vmul.f32 %v281, %v286
        %v389 = vmul.f32 %v278, %v288
        %v390 = vmul.f32 %v279, %v289
        %v391 = vmul.f32 %v280, %v290
        %v392 = vmul.f32 %v281, %v291
        %v393 = vmul.f32 %v278, %v293
        %v394 = vmul.f32 %v279, %v294
        %v395 = vmul.f32 %v280, %v295
        %v396 = vmul.f32 %v281, %v296
        %v397 = vmul.f32 %v283, %v288
        %v398 = vmul.f32 %v284, %v289
        %v399 = vmul.f32 %v285, %v290
        %v400 = vmul.f32 %v286, %v291
        %v401 = vmul.f32 %v283, %v293
        %v402 = vmul.f32 %v284, %v294
        %v403 = vmul.f32 %v285, %v295
        %v404 = vmul.f32 %v286, %v296
        %v405 = vmul.f32 %v288, %v293
        %v406 = vmul.f32 %v289, %v294
        %v407 = vmul.f32 %v290, %v295
        %v408 = vmul.f32 %v291, %v296
        %v409 = vld [vmem:[%s2] sm:$0xff]
        %v410 = vld [vmem:[%s2 + $0x8] sm:$0xff]
        %v411 = vld [vmem:[%s2 + $0x10] sm:$0xff]
        %v412 = vld [vmem:[%s2 + $0x18] sm:$0xff]
        %v413 = vld [vmem:[%s3] sm:$0xff]
        %v414 = vld [vmem:[%s3 + $0x8] sm:$0xff]
        %v415 = vld [vmem:[%s3 + $0x10] sm:$0xff]
        %v416 = vld [vmem:[%s3 + $0x18] sm:$0xff]
        %418 = vset.pattern.permute.xlu0 0
        %419 = vperm.xlu0 %418, %v413
        %v420 = vpop.permute.xlu0 %419
        %423 = vset.pattern.permute.xlu0 0
        %424 = vperm.xlu0 %423, %v414
        %v425 = vpop.permute.xlu0 %424
        %428 = vset.pattern.permute.xlu0 0
        %429 = vperm.xlu0 %428, %v415
        %v430 = vpop.permute.xlu0 %429
        %433 = vset.pattern.permute.xlu0 0
        %434 = vperm.xlu0 %433, %v416
        %v435 = vpop.permute.xlu0 %434
        %vm437 = vcmask 261120
        %v439 = vsel %vm437, %v409, 0
        %v442 = vsel %vm437, %v410, 0
        %v445 = vsel %vm437, %v411, 0
        %v448 = vsel %vm437, %v412, 0
        %450 = vmatpush.msra.mxu0 0.0
        %451 = vmatpush.msra.mxu0 0.0
        %452 = vmatpush.msra.mxu0 0.0
        %453 = vmatpush.msra.mxu0 0.0
        %454 = vmatpush.msra.mxu0 0.0
        %455 = vmatpush.msra.mxu0 0.0
        %456 = vmatpush.msra.mxu0 0.0
        %457 = vmatpush.msra.mxu0 0.0
        %458 = vmatpush.msra.mxu0 0.0
        %459 = vmatpush.msra.mxu0 0.0
        %460 = vmatpush.msra.mxu0 0.0
        %461 = vmatpush.msra.mxu0 0.0
        %462 = vmatpush.msra.mxu0 %v300
        %463 = vmatpush.msra.mxu0 %v299
        %464 = vmatpush.msra.mxu0 %v298
        %465 = vmatpush.msra.mxu0 %v297
        %466 = vmatmul.f32.gmra.mxu0 %v439
        %v467 = vpop.f32.mrf.mxu0
        %v468 = vadd.f32 %v420, %v467
        %469 = vmatmul.f32.gmra.mxu0 %v442
        %v470 = vpop.f32.mrf.mxu0
        %v471 = vadd.f32 %v425, %v470
        %472 = vmatmul.f32.gmra.mxu0 %v445
        %v473 = vpop.f32.mrf.mxu0
        %v474 = vadd.f32 %v430, %v473
        %475 = vmatmul.f32.gmra.mxu0 %v448
        %v476 = vpop.f32.mrf.mxu0
        %v477 = vadd.f32 %v435, %v476
        %478 = vdwg.mxu0
        %479 = vmatpush.msra.mxu0 0.0
        %480 = vmatpush.msra.mxu0 0.0
        %481 = vmatpush.msra.mxu0 0.0
        %482 = vmatpush.msra.mxu0 0.0
        %483 = vmatpush.msra.mxu0 0.0
        %484 = vmatpush.msra.mxu0 0.0
        %485 = vmatpush.msra.mxu0 0.0
        %486 = vmatpush.msra.mxu0 0.0
        %487 = vmatpush.msra.mxu0 0.0
        %488 = vmatpush.msra.mxu0 0.0
        %489 = vmatpush.msra.mxu0 0.0
        %490 = vmatpush.msra.mxu0 0.0
        %491 = vmatpush.msra.mxu0 %v304
        %492 = vmatpush.msra.mxu0 %v303
        %493 = vmatpush.msra.mxu0 %v302
        %494 = vmatpush.msra.mxu0 %v301
        %495 = vmatmul.f32.gmra.mxu0 %v439
        %v496 = vpop.f32.mrf.mxu0
        %v497 = vadd.f32 %v420, %v496
        %498 = vmatmul.f32.gmra.mxu0 %v442
        %v499 = vpop.f32.mrf.mxu0
        %v500 = vadd.f32 %v425, %v499
        %501 = vmatmul.f32.gmra.mxu0 %v445
        %v502 = vpop.f32.mrf.mxu0
        %v503 = vadd.f32 %v430, %v502
        %504 = vmatmul.f32.gmra.mxu0 %v448
        %v505 = vpop.f32.mrf.mxu0
        %v506 = vadd.f32 %v435, %v505
        %507 = vdwg.mxu0
        %508 = vmatpush.msra.mxu0 0.0
        %509 = vmatpush.msra.mxu0 0.0
        %510 = vmatpush.msra.mxu0 0.0
        %511 = vmatpush.msra.mxu0 0.0
        %512 = vmatpush.msra.mxu0 0.0
        %513 = vmatpush.msra.mxu0 0.0
        %514 = vmatpush.msra.mxu0 0.0
        %515 = vmatpush.msra.mxu0 0.0
        %516 = vmatpush.msra.mxu0 0.0
        %517 = vmatpush.msra.mxu0 0.0
        %518 = vmatpush.msra.mxu0 0.0
        %519 = vmatpush.msra.mxu0 0.0
        %520 = vmatpush.msra.mxu0 %v308
        %521 = vmatpush.msra.mxu0 %v307
        %522 = vmatpush.msra.mxu0 %v306
        %523 = vmatpush.msra.mxu0 %v305
        %524 = vmatmul.f32.gmra.mxu0 %v439
        %v525 = vpop.f32.mrf.mxu0
        %v526 = vadd.f32 %v420, %v525
        %527 = vmatmul.f32.gmra.mxu0 %v442
        %v528 = vpop.f32.mrf.mxu0
        %v529 = vadd.f32 %v425, %v528
        %530 = vmatmul.f32.gmra.mxu0 %v445
        %v531 = vpop.f32.mrf.mxu0
        %v532 = vadd.f32 %v430, %v531
        %533 = vmatmul.f32.gmra.mxu0 %v448
        %v534 = vpop.f32.mrf.mxu0
        %v535 = vadd.f32 %v435, %v534
        %536 = vdwg.mxu0
        %537 = vmatpush.msra.mxu0 0.0
        %538 = vmatpush.msra.mxu0 0.0
        %539 = vmatpush.msra.mxu0 0.0
        %540 = vmatpush.msra.mxu0 0.0
        %541 = vmatpush.msra.mxu0 0.0
        %542 = vmatpush.msra.mxu0 0.0
        %543 = vmatpush.msra.mxu0 0.0
        %544 = vmatpush.msra.mxu0 0.0
        %545 = vmatpush.msra.mxu0 0.0
        %546 = vmatpush.msra.mxu0 0.0
        %547 = vmatpush.msra.mxu0 0.0
        %548 = vmatpush.msra.mxu0 0.0
        %549 = vmatpush.msra.mxu0 %v312
        %550 = vmatpush.msra.mxu0 %v311
        %551 = vmatpush.msra.mxu0 %v310
        %552 = vmatpush.msra.mxu0 %v309
        %553 = vmatmul.f32.gmra.mxu0 %v439
        %v554 = vpop.f32.mrf.mxu0
        %v555 = vadd.f32 %v420, %v554
        %556 = vmatmul.f32.gmra.mxu0 %v442
        %v557 = vpop.f32.mrf.mxu0
        %v558 = vadd.f32 %v425, %v557
        %559 = vmatmul.f32.gmra.mxu0 %v445
        %v560 = vpop.f32.mrf.mxu0
        %v561 = vadd.f32 %v430, %v560
        %562 = vmatmul.f32.gmra.mxu0 %v448
        %v563 = vpop.f32.mrf.mxu0
        %v564 = vadd.f32 %v435, %v563
        %565 = vdwg.mxu0
        %566 = vmatpush.msra.mxu0 0.0
        %567 = vmatpush.msra.mxu0 0.0
        %568 = vmatpush.msra.mxu0 0.0
        %569 = vmatpush.msra.mxu0 0.0
        %570 = vmatpush.msra.mxu0 0.0
        %571 = vmatpush.msra.mxu0 0.0
        %572 = vmatpush.msra.mxu0 0.0
        %573 = vmatpush.msra.mxu0 0.0
        %574 = vmatpush.msra.mxu0 0.0
        %575 = vmatpush.msra.mxu0 0.0
        %576 = vmatpush.msra.mxu0 0.0
        %577 = vmatpush.msra.mxu0 0.0
        %578 = vmatpush.msra.mxu0 %v316
        %579 = vmatpush.msra.mxu0 %v315
        %580 = vmatpush.msra.mxu0 %v314
        %581 = vmatpush.msra.mxu0 %v313
        %582 = vmatmul.f32.gmra.mxu0 %v439
        %v583 = vpop.f32.mrf.mxu0
        %v584 = vadd.f32 %v420, %v583
        %585 = vmatmul.f32.gmra.mxu0 %v442
        %v586 = vpop.f32.mrf.mxu0
        %v587 = vadd.f32 %v425, %v586
        %588 = vmatmul.f32.gmra.mxu0 %v445
        %v589 = vpop.f32.mrf.mxu0
        %v590 = vadd.f32 %v430, %v589
        %591 = vmatmul.f32.gmra.mxu0 %v448
        %v592 = vpop.f32.mrf.mxu0
        %v593 = vadd.f32 %v435, %v592
        %594 = vdwg.mxu0
        %595 = vmatpush.msra.mxu0 0.0
        %596 = vmatpush.msra.mxu0 0.0
        %597 = vmatpush.msra.mxu0 0.0
        %598 = vmatpush.msra.mxu0 0.0
        %599 = vmatpush.msra.mxu0 0.0
        %600 = vmatpush.msra.mxu0 0.0
        %601 = vmatpush.msra.mxu0 0.0
        %602 = vmatpush.msra.mxu0 0.0
        %603 = vmatpush.msra.mxu0 0.0
        %604 = vmatpush.msra.mxu0 0.0
        %605 = vmatpush.msra.mxu0 0.0
        %606 = vmatpush.msra.mxu0 0.0
        %607 = vmatpush.msra.mxu0 %v320
        %608 = vmatpush.msra.mxu0 %v319
        %609 = vmatpush.msra.mxu0 %v318
        %610 = vmatpush.msra.mxu0 %v317
        %611 = vmatmul.f32.gmra.mxu0 %v439
        %v612 = vpop.f32.mrf.mxu0
        %v613 = vadd.f32 %v420, %v612
        %614 = vmatmul.f32.gmra.mxu0 %v442
        %v615 = vpop.f32.mrf.mxu0
        %v616 = vadd.f32 %v425, %v615
        %617 = vmatmul.f32.gmra.mxu0 %v445
        %v618 = vpop.f32.mrf.mxu0
        %v619 = vadd.f32 %v430, %v618
        %620 = vmatmul.f32.gmra.mxu0 %v448
        %v621 = vpop.f32.mrf.mxu0
        %v622 = vadd.f32 %v435, %v621
        %623 = vdwg.mxu0
        %624 = vmatpush.msra.mxu0 0.0
        %625 = vmatpush.msra.mxu0 0.0
        %626 = vmatpush.msra.mxu0 0.0
        %627 = vmatpush.msra.mxu0 0.0
        %628 = vmatpush.msra.mxu0 0.0
        %629 = vmatpush.msra.mxu0 0.0
        %630 = vmatpush.msra.mxu0 0.0
        %631 = vmatpush.msra.mxu0 0.0
        %632 = vmatpush.msra.mxu0 0.0
        %633 = vmatpush.msra.mxu0 0.0
        %634 = vmatpush.msra.mxu0 0.0
        %635 = vmatpush.msra.mxu0 0.0
        %636 = vmatpush.msra.mxu0 %v324
        %637 = vmatpush.msra.mxu0 %v323
        %638 = vmatpush.msra.mxu0 %v322
        %639 = vmatpush.msra.mxu0 %v321
        %640 = vmatmul.f32.gmra.mxu0 %v439
        %v641 = vpop.f32.mrf.mxu0
        %v642 = vadd.f32 %v420, %v641
        %643 = vmatmul.f32.gmra.mxu0 %v442
        %v644 = vpop.f32.mrf.mxu0
        %v645 = vadd.f32 %v425, %v644
        %646 = vmatmul.f32.gmra.mxu0 %v445
        %v647 = vpop.f32.mrf.mxu0
        %v648 = vadd.f32 %v430, %v647
        %649 = vmatmul.f32.gmra.mxu0 %v448
        %v650 = vpop.f32.mrf.mxu0
        %v651 = vadd.f32 %v435, %v650
        %652 = vdwg.mxu0
        %653 = vmatpush.msra.mxu0 0.0
        %654 = vmatpush.msra.mxu0 0.0
        %655 = vmatpush.msra.mxu0 0.0
        %656 = vmatpush.msra.mxu0 0.0
        %657 = vmatpush.msra.mxu0 0.0
        %658 = vmatpush.msra.mxu0 0.0
        %659 = vmatpush.msra.mxu0 0.0
        %660 = vmatpush.msra.mxu0 0.0
        %661 = vmatpush.msra.mxu0 0.0
        %662 = vmatpush.msra.mxu0 0.0
        %663 = vmatpush.msra.mxu0 0.0
        %664 = vmatpush.msra.mxu0 0.0
        %665 = vmatpush.msra.mxu0 %v328
        %666 = vmatpush.msra.mxu0 %v327
        %667 = vmatpush.msra.mxu0 %v326
        %668 = vmatpush.msra.mxu0 %v325
        %669 = vmatmul.f32.gmra.mxu0 %v439
        %v670 = vpop.f32.mrf.mxu0
        %v671 = vadd.f32 %v420, %v670
        %672 = vmatmul.f32.gmra.mxu0 %v442
        %v673 = vpop.f32.mrf.mxu0
        %v674 = vadd.f32 %v425, %v673
        %675 = vmatmul.f32.gmra.mxu0 %v445
        %v676 = vpop.f32.mrf.mxu0
        %v677 = vadd.f32 %v430, %v676
        %678 = vmatmul.f32.gmra.mxu0 %v448
        %v679 = vpop.f32.mrf.mxu0
        %v680 = vadd.f32 %v435, %v679
        %681 = vdwg.mxu0
        %682 = vmatpush.msra.mxu0 0.0
        %683 = vmatpush.msra.mxu0 0.0
        %684 = vmatpush.msra.mxu0 0.0
        %685 = vmatpush.msra.mxu0 0.0
        %686 = vmatpush.msra.mxu0 0.0
        %687 = vmatpush.msra.mxu0 0.0
        %688 = vmatpush.msra.mxu0 0.0
        %689 = vmatpush.msra.mxu0 0.0
        %690 = vmatpush.msra.mxu0 0.0
        %691 = vmatpush.msra.mxu0 0.0
        %692 = vmatpush.msra.mxu0 0.0
        %693 = vmatpush.msra.mxu0 0.0
        %694 = vmatpush.msra.mxu0 %v332
        %695 = vmatpush.msra.mxu0 %v331
        %696 = vmatpush.msra.mxu0 %v330
        %697 = vmatpush.msra.mxu0 %v329
        %698 = vmatmul.f32.gmra.mxu0 %v439
        %v699 = vpop.f32.mrf.mxu0
        %v700 = vadd.f32 %v420, %v699
        %701 = vmatmul.f32.gmra.mxu0 %v442
        %v702 = vpop.f32.mrf.mxu0
        %v703 = vadd.f32 %v425, %v702
        %704 = vmatmul.f32.gmra.mxu0 %v445
        %v705 = vpop.f32.mrf.mxu0
        %v706 = vadd.f32 %v430, %v705
        %707 = vmatmul.f32.gmra.mxu0 %v448
        %v708 = vpop.f32.mrf.mxu0
        %v709 = vadd.f32 %v435, %v708
        %710 = vdwg.mxu0
        %711 = vmatpush.msra.mxu0 0.0
        %712 = vmatpush.msra.mxu0 0.0
        %713 = vmatpush.msra.mxu0 0.0
        %714 = vmatpush.msra.mxu0 0.0
        %715 = vmatpush.msra.mxu0 0.0
        %716 = vmatpush.msra.mxu0 0.0
        %717 = vmatpush.msra.mxu0 0.0
        %718 = vmatpush.msra.mxu0 0.0
        %719 = vmatpush.msra.mxu0 0.0
        %720 = vmatpush.msra.mxu0 0.0
        %721 = vmatpush.msra.mxu0 0.0
        %722 = vmatpush.msra.mxu0 0.0
        %723 = vmatpush.msra.mxu0 %v336
        %724 = vmatpush.msra.mxu0 %v335
        %725 = vmatpush.msra.mxu0 %v334
        %726 = vmatpush.msra.mxu0 %v333
        %727 = vmatmul.f32.gmra.mxu0 %v439
        %v728 = vpop.f32.mrf.mxu0
        %v729 = vadd.f32 %v420, %v728
        %730 = vmatmul.f32.gmra.mxu0 %v442
        %v731 = vpop.f32.mrf.mxu0
        %v732 = vadd.f32 %v425, %v731
        %733 = vmatmul.f32.gmra.mxu0 %v445
        %v734 = vpop.f32.mrf.mxu0
        %v735 = vadd.f32 %v430, %v734
        %736 = vmatmul.f32.gmra.mxu0 %v448
        %v737 = vpop.f32.mrf.mxu0
        %v738 = vadd.f32 %v435, %v737
        %739 = vdwg.mxu0
        %740 = vmatpush.msra.mxu0 0.0
        %741 = vmatpush.msra.mxu0 0.0
        %742 = vmatpush.msra.mxu0 0.0
        %743 = vmatpush.msra.mxu0 0.0
        %744 = vmatpush.msra.mxu0 0.0
        %745 = vmatpush.msra.mxu0 0.0
        %746 = vmatpush.msra.mxu0 0.0
        %747 = vmatpush.msra.mxu0 0.0
        %748 = vmatpush.msra.mxu0 0.0
        %749 = vmatpush.msra.mxu0 0.0
        %750 = vmatpush.msra.mxu0 0.0
        %751 = vmatpush.msra.mxu0 0.0
        %752 = vmatpush.msra.mxu0 %v340
        %753 = vmatpush.msra.mxu0 %v339
        %754 = vmatpush.msra.mxu0 %v338
        %755 = vmatpush.msra.mxu0 %v337
        %756 = vmatmul.f32.gmra.mxu0 %v439
        %v757 = vpop.f32.mrf.mxu0
        %v758 = vadd.f32 %v420, %v757
        %759 = vmatmul.f32.gmra.mxu0 %v442
        %v760 = vpop.f32.mrf.mxu0
        %v761 = vadd.f32 %v425, %v760
        %762 = vmatmul.f32.gmra.mxu0 %v445
        %v763 = vpop.f32.mrf.mxu0
        %v764 = vadd.f32 %v430, %v763
        %765 = vmatmul.f32.gmra.mxu0 %v448
        %v766 = vpop.f32.mrf.mxu0
        %v767 = vadd.f32 %v435, %v766
        %768 = vdwg.mxu0
        %769 = vmatpush.msra.mxu0 0.0
        %770 = vmatpush.msra.mxu0 0.0
        %771 = vmatpush.msra.mxu0 0.0
        %772 = vmatpush.msra.mxu0 0.0
        %773 = vmatpush.msra.mxu0 0.0
        %774 = vmatpush.msra.mxu0 0.0
        %775 = vmatpush.msra.mxu0 0.0
        %776 = vmatpush.msra.mxu0 0.0
        %777 = vmatpush.msra.mxu0 0.0
        %778 = vmatpush.msra.mxu0 0.0
        %779 = vmatpush.msra.mxu0 0.0
        %780 = vmatpush.msra.mxu0 0.0
        %781 = vmatpush.msra.mxu0 %v344
        %782 = vmatpush.msra.mxu0 %v343
        %783 = vmatpush.msra.mxu0 %v342
        %784 = vmatpush.msra.mxu0 %v341
        %785 = vmatmul.f32.gmra.mxu0 %v439
        %v786 = vpop.f32.mrf.mxu0
        %v787 = vadd.f32 %v420, %v786
        %788 = vmatmul.f32.gmra.mxu0 %v442
        %v789 = vpop.f32.mrf.mxu0
        %v790 = vadd.f32 %v425, %v789
        %791 = vmatmul.f32.gmra.mxu0 %v445
        %v792 = vpop.f32.mrf.mxu0
        %v793 = vadd.f32 %v430, %v792
        %794 = vmatmul.f32.gmra.mxu0 %v448
        %v795 = vpop.f32.mrf.mxu0
        %v796 = vadd.f32 %v435, %v795
        %797 = vdwg.mxu0
        %798 = vmatpush.msra.mxu0 0.0
        %799 = vmatpush.msra.mxu0 0.0
        %800 = vmatpush.msra.mxu0 0.0
        %801 = vmatpush.msra.mxu0 0.0
        %802 = vmatpush.msra.mxu0 0.0
        %803 = vmatpush.msra.mxu0 0.0
        %804 = vmatpush.msra.mxu0 0.0
        %805 = vmatpush.msra.mxu0 0.0
        %806 = vmatpush.msra.mxu0 0.0
        %807 = vmatpush.msra.mxu0 0.0
        %808 = vmatpush.msra.mxu0 0.0
        %809 = vmatpush.msra.mxu0 0.0
        %810 = vmatpush.msra.mxu0 %v348
        %811 = vmatpush.msra.mxu0 %v347
        %812 = vmatpush.msra.mxu0 %v346
        %813 = vmatpush.msra.mxu0 %v345
        %814 = vmatmul.f32.gmra.mxu0 %v439
        %v815 = vpop.f32.mrf.mxu0
        %v816 = vadd.f32 %v420, %v815
        %817 = vmatmul.f32.gmra.mxu0 %v442
        %v818 = vpop.f32.mrf.mxu0
        %v819 = vadd.f32 %v425, %v818
        %820 = vmatmul.f32.gmra.mxu0 %v445
        %v821 = vpop.f32.mrf.mxu0
        %v822 = vadd.f32 %v430, %v821
        %823 = vmatmul.f32.gmra.mxu0 %v448
        %v824 = vpop.f32.mrf.mxu0
        %v825 = vadd.f32 %v435, %v824
        %826 = vdwg.mxu0
        %827 = vmatpush.msra.mxu0 0.0
        %828 = vmatpush.msra.mxu0 0.0
        %829 = vmatpush.msra.mxu0 0.0
        %830 = vmatpush.msra.mxu0 0.0
        %831 = vmatpush.msra.mxu0 0.0
        %832 = vmatpush.msra.mxu0 0.0
        %833 = vmatpush.msra.mxu0 0.0
        %834 = vmatpush.msra.mxu0 0.0
        %835 = vmatpush.msra.mxu0 0.0
        %836 = vmatpush.msra.mxu0 0.0
        %837 = vmatpush.msra.mxu0 0.0
        %838 = vmatpush.msra.mxu0 0.0
        %839 = vmatpush.msra.mxu0 %v352
        %840 = vmatpush.msra.mxu0 %v351
        %841 = vmatpush.msra.mxu0 %v350
        %842 = vmatpush.msra.mxu0 %v349
        %843 = vmatmul.f32.gmra.mxu0 %v439
        %v844 = vpop.f32.mrf.mxu0
        %v845 = vadd.f32 %v420, %v844
        %846 = vmatmul.f32.gmra.mxu0 %v442
        %v847 = vpop.f32.mrf.mxu0
        %v848 = vadd.f32 %v425, %v847
        %849 = vmatmul.f32.gmra.mxu0 %v445
        %v850 = vpop.f32.mrf.mxu0
        %v851 = vadd.f32 %v430, %v850
        %852 = vmatmul.f32.gmra.mxu0 %v448
        %v853 = vpop.f32.mrf.mxu0
        %v854 = vadd.f32 %v435, %v853
        %855 = vdwg.mxu0
        %856 = vmatpush.msra.mxu0 0.0
        %857 = vmatpush.msra.mxu0 0.0
        %858 = vmatpush.msra.mxu0 0.0
        %859 = vmatpush.msra.mxu0 0.0
        %860 = vmatpush.msra.mxu0 0.0
        %861 = vmatpush.msra.mxu0 0.0
        %862 = vmatpush.msra.mxu0 0.0
        %863 = vmatpush.msra.mxu0 0.0
        %864 = vmatpush.msra.mxu0 0.0
        %865 = vmatpush.msra.mxu0 0.0
        %866 = vmatpush.msra.mxu0 0.0
        %867 = vmatpush.msra.mxu0 0.0
        %868 = vmatpush.msra.mxu0 %v356
        %869 = vmatpush.msra.mxu0 %v355
        %870 = vmatpush.msra.mxu0 %v354
        %871 = vmatpush.msra.mxu0 %v353
        %872 = vmatmul.f32.gmra.mxu0 %v439
        %v873 = vpop.f32.mrf.mxu0
        %v874 = vadd.f32 %v420, %v873
        %875 = vmatmul.f32.gmra.mxu0 %v442
        %v876 = vpop.f32.mrf.mxu0
        %v877 = vadd.f32 %v425, %v876
        %878 = vmatmul.f32.gmra.mxu0 %v445
        %v879 = vpop.f32.mrf.mxu0
        %v880 = vadd.f32 %v430, %v879
        %881 = vmatmul.f32.gmra.mxu0 %v448
        %v882 = vpop.f32.mrf.mxu0
        %v883 = vadd.f32 %v435, %v882
        %884 = vdwg.mxu0
        %885 = vmatpush.msra.mxu0 0.0
        %886 = vmatpush.msra.mxu0 0.0
        %887 = vmatpush.msra.mxu0 0.0
        %888 = vmatpush.msra.mxu0 0.0
        %889 = vmatpush.msra.mxu0 0.0
        %890 = vmatpush.msra.mxu0 0.0
        %891 = vmatpush.msra.mxu0 0.0
        %892 = vmatpush.msra.mxu0 0.0
        %893 = vmatpush.msra.mxu0 0.0
        %894 = vmatpush.msra.mxu0 0.0
        %895 = vmatpush.msra.mxu0 0.0
        %896 = vmatpush.msra.mxu0 0.0
        %897 = vmatpush.msra.mxu0 %v360
        %898 = vmatpush.msra.mxu0 %v359
        %899 = vmatpush.msra.mxu0 %v358
        %900 = vmatpush.msra.mxu0 %v357
        %901 = vmatmul.f32.gmra.mxu0 %v439
        %v902 = vpop.f32.mrf.mxu0
        %v903 = vadd.f32 %v420, %v902
        %904 = vmatmul.f32.gmra.mxu0 %v442
        %v905 = vpop.f32.mrf.mxu0
        %v906 = vadd.f32 %v425, %v905
        %907 = vmatmul.f32.gmra.mxu0 %v445
        %v908 = vpop.f32.mrf.mxu0
        %v909 = vadd.f32 %v430, %v908
        %910 = vmatmul.f32.gmra.mxu0 %v448
        %v911 = vpop.f32.mrf.mxu0
        %v912 = vadd.f32 %v435, %v911
        %913 = vdwg.mxu0
        %914 = vmatpush.msra.mxu0 0.0
        %915 = vmatpush.msra.mxu0 0.0
        %916 = vmatpush.msra.mxu0 0.0
        %917 = vmatpush.msra.mxu0 0.0
        %918 = vmatpush.msra.mxu0 0.0
        %919 = vmatpush.msra.mxu0 0.0
        %920 = vmatpush.msra.mxu0 0.0
        %921 = vmatpush.msra.mxu0 0.0
        %922 = vmatpush.msra.mxu0 0.0
        %923 = vmatpush.msra.mxu0 0.0
        %924 = vmatpush.msra.mxu0 0.0
        %925 = vmatpush.msra.mxu0 0.0
        %926 = vmatpush.msra.mxu0 %v364
        %927 = vmatpush.msra.mxu0 %v363
        %928 = vmatpush.msra.mxu0 %v362
        %929 = vmatpush.msra.mxu0 %v361
        %930 = vmatmul.f32.gmra.mxu0 %v439
        %v931 = vpop.f32.mrf.mxu0
        %v932 = vadd.f32 %v420, %v931
        %933 = vmatmul.f32.gmra.mxu0 %v442
        %v934 = vpop.f32.mrf.mxu0
        %v935 = vadd.f32 %v425, %v934
        %936 = vmatmul.f32.gmra.mxu0 %v445
        %v937 = vpop.f32.mrf.mxu0
        %v938 = vadd.f32 %v430, %v937
        %939 = vmatmul.f32.gmra.mxu0 %v448
        %v940 = vpop.f32.mrf.mxu0
        %v941 = vadd.f32 %v435, %v940
        %942 = vdwg.mxu0
        %943 = vmatpush.msra.mxu0 0.0
        %944 = vmatpush.msra.mxu0 0.0
        %945 = vmatpush.msra.mxu0 0.0
        %946 = vmatpush.msra.mxu0 0.0
        %947 = vmatpush.msra.mxu0 0.0
        %948 = vmatpush.msra.mxu0 0.0
        %949 = vmatpush.msra.mxu0 0.0
        %950 = vmatpush.msra.mxu0 0.0
        %951 = vmatpush.msra.mxu0 0.0
        %952 = vmatpush.msra.mxu0 0.0
        %953 = vmatpush.msra.mxu0 0.0
        %954 = vmatpush.msra.mxu0 0.0
        %955 = vmatpush.msra.mxu0 %v368
        %956 = vmatpush.msra.mxu0 %v367
        %957 = vmatpush.msra.mxu0 %v366
        %958 = vmatpush.msra.mxu0 %v365
        %959 = vmatmul.f32.gmra.mxu0 %v439
        %v960 = vpop.f32.mrf.mxu0
        %v961 = vadd.f32 %v420, %v960
        %962 = vmatmul.f32.gmra.mxu0 %v442
        %v963 = vpop.f32.mrf.mxu0
        %v964 = vadd.f32 %v425, %v963
        %965 = vmatmul.f32.gmra.mxu0 %v445
        %v966 = vpop.f32.mrf.mxu0
        %v967 = vadd.f32 %v430, %v966
        %968 = vmatmul.f32.gmra.mxu0 %v448
        %v969 = vpop.f32.mrf.mxu0
        %v970 = vadd.f32 %v435, %v969
        %971 = vdwg.mxu0
        %972 = vmatpush.msra.mxu0 0.0
        %973 = vmatpush.msra.mxu0 0.0
        %974 = vmatpush.msra.mxu0 0.0
        %975 = vmatpush.msra.mxu0 0.0
        %976 = vmatpush.msra.mxu0 0.0
        %977 = vmatpush.msra.mxu0 0.0
        %978 = vmatpush.msra.mxu0 0.0
        %979 = vmatpush.msra.mxu0 0.0
        %980 = vmatpush.msra.mxu0 0.0
        %981 = vmatpush.msra.mxu0 0.0
        %982 = vmatpush.msra.mxu0 0.0
        %983 = vmatpush.msra.mxu0 0.0
        %984 = vmatpush.msra.mxu0 %v372
        %985 = vmatpush.msra.mxu0 %v371
        %986 = vmatpush.msra.mxu0 %v370
        %987 = vmatpush.msra.mxu0 %v369
        %988 = vmatmul.f32.gmra.mxu0 %v439
        %v989 = vpop.f32.mrf.mxu0
        %v990 = vadd.f32 %v420, %v989
        %991 = vmatmul.f32.gmra.mxu0 %v442
        %v992 = vpop.f32.mrf.mxu0
        %v993 = vadd.f32 %v425, %v992
        %994 = vmatmul.f32.gmra.mxu0 %v445
        %v995 = vpop.f32.mrf.mxu0
        %v996 = vadd.f32 %v430, %v995
        %997 = vmatmul.f32.gmra.mxu0 %v448
        %v998 = vpop.f32.mrf.mxu0
        %v999 = vadd.f32 %v435, %v998
        %1000 = vdwg.mxu0
        %1001 = vmatpush.msra.mxu0 0.0
        %1002 = vmatpush.msra.mxu0 0.0
        %1003 = vmatpush.msra.mxu0 0.0
        %1004 = vmatpush.msra.mxu0 0.0
        %1005 = vmatpush.msra.mxu0 0.0
        %1006 = vmatpush.msra.mxu0 0.0
        %1007 = vmatpush.msra.mxu0 0.0
        %1008 = vmatpush.msra.mxu0 0.0
        %1009 = vmatpush.msra.mxu0 0.0
        %1010 = vmatpush.msra.mxu0 0.0
        %1011 = vmatpush.msra.mxu0 0.0
        %1012 = vmatpush.msra.mxu0 0.0
        %1013 = vmatpush.msra.mxu0 %v376
        %1014 = vmatpush.msra.mxu0 %v375
        %1015 = vmatpush.msra.mxu0 %v374
        %1016 = vmatpush.msra.mxu0 %v373
        %1017 = vmatmul.f32.gmra.mxu0 %v439
        %v1018 = vpop.f32.mrf.mxu0
        %v1019 = vadd.f32 %v420, %v1018
        %1020 = vmatmul.f32.gmra.mxu0 %v442
        %v1021 = vpop.f32.mrf.mxu0
        %v1022 = vadd.f32 %v425, %v1021
        %1023 = vmatmul.f32.gmra.mxu0 %v445
        %v1024 = vpop.f32.mrf.mxu0
        %v1025 = vadd.f32 %v430, %v1024
        %1026 = vmatmul.f32.gmra.mxu0 %v448
        %v1027 = vpop.f32.mrf.mxu0
        %v1028 = vadd.f32 %v435, %v1027
        %1029 = vdwg.mxu0
        %1030 = vmatpush.msra.mxu0 0.0
        %1031 = vmatpush.msra.mxu0 0.0
        %1032 = vmatpush.msra.mxu0 0.0
        %1033 = vmatpush.msra.mxu0 0.0
        %1034 = vmatpush.msra.mxu0 0.0
        %1035 = vmatpush.msra.mxu0 0.0
        %1036 = vmatpush.msra.mxu0 0.0
        %1037 = vmatpush.msra.mxu0 0.0
        %1038 = vmatpush.msra.mxu0 0.0
        %1039 = vmatpush.msra.mxu0 0.0
        %1040 = vmatpush.msra.mxu0 0.0
        %1041 = vmatpush.msra.mxu0 0.0
        %1042 = vmatpush.msra.mxu0 %v380
        %1043 = vmatpush.msra.mxu0 %v379
        %1044 = vmatpush.msra.mxu0 %v378
        %1045 = vmatpush.msra.mxu0 %v377
        %1046 = vmatmul.f32.gmra.mxu0 %v439
        %v1047 = vpop.f32.mrf.mxu0
        %v1048 = vadd.f32 %v420, %v1047
        %1049 = vmatmul.f32.gmra.mxu0 %v442
        %v1050 = vpop.f32.mrf.mxu0
        %v1051 = vadd.f32 %v425, %v1050
        %1052 = vmatmul.f32.gmra.mxu0 %v445
        %v1053 = vpop.f32.mrf.mxu0
        %v1054 = vadd.f32 %v430, %v1053
        %1055 = vmatmul.f32.gmra.mxu0 %v448
        %v1056 = vpop.f32.mrf.mxu0
        %v1057 = vadd.f32 %v435, %v1056
        %1058 = vdwg.mxu0
        %1059 = vmatpush.msra.mxu0 0.0
        %1060 = vmatpush.msra.mxu0 0.0
        %1061 = vmatpush.msra.mxu0 0.0
        %1062 = vmatpush.msra.mxu0 0.0
        %1063 = vmatpush.msra.mxu0 0.0
        %1064 = vmatpush.msra.mxu0 0.0
        %1065 = vmatpush.msra.mxu0 0.0
        %1066 = vmatpush.msra.mxu0 0.0
        %1067 = vmatpush.msra.mxu0 0.0
        %1068 = vmatpush.msra.mxu0 0.0
        %1069 = vmatpush.msra.mxu0 0.0
        %1070 = vmatpush.msra.mxu0 0.0
        %1071 = vmatpush.msra.mxu0 %v384
        %1072 = vmatpush.msra.mxu0 %v383
        %1073 = vmatpush.msra.mxu0 %v382
        %1074 = vmatpush.msra.mxu0 %v381
        %1075 = vmatmul.f32.gmra.mxu0 %v439
        %v1076 = vpop.f32.mrf.mxu0
        %v1077 = vadd.f32 %v420, %v1076
        %1078 = vmatmul.f32.gmra.mxu0 %v442
        %v1079 = vpop.f32.mrf.mxu0
        %v1080 = vadd.f32 %v425, %v1079
        %1081 = vmatmul.f32.gmra.mxu0 %v445
        %v1082 = vpop.f32.mrf.mxu0
        %v1083 = vadd.f32 %v430, %v1082
        %1084 = vmatmul.f32.gmra.mxu0 %v448
        %v1085 = vpop.f32.mrf.mxu0
        %v1086 = vadd.f32 %v435, %v1085
        %1087 = vdwg.mxu0
        %1088 = vmatpush.msra.mxu0 0.0
        %1089 = vmatpush.msra.mxu0 0.0
        %1090 = vmatpush.msra.mxu0 0.0
        %1091 = vmatpush.msra.mxu0 0.0
        %1092 = vmatpush.msra.mxu0 0.0
        %1093 = vmatpush.msra.mxu0 0.0
        %1094 = vmatpush.msra.mxu0 0.0
        %1095 = vmatpush.msra.mxu0 0.0
        %1096 = vmatpush.msra.mxu0 0.0
        %1097 = vmatpush.msra.mxu0 0.0
        %1098 = vmatpush.msra.mxu0 0.0
        %1099 = vmatpush.msra.mxu0 0.0
        %1100 = vmatpush.msra.mxu0 %v388
        %1101 = vmatpush.msra.mxu0 %v387
        %1102 = vmatpush.msra.mxu0 %v386
        %1103 = vmatpush.msra.mxu0 %v385
        %1104 = vmatmul.f32.gmra.mxu0 %v439
        %v1105 = vpop.f32.mrf.mxu0
        %v1106 = vadd.f32 %v420, %v1105
        %1107 = vmatmul.f32.gmra.mxu0 %v442
        %v1108 = vpop.f32.mrf.mxu0
        %v1109 = vadd.f32 %v425, %v1108
        %1110 = vmatmul.f32.gmra.mxu0 %v445
        %v1111 = vpop.f32.mrf.mxu0
        %v1112 = vadd.f32 %v430, %v1111
        %1113 = vmatmul.f32.gmra.mxu0 %v448
        %v1114 = vpop.f32.mrf.mxu0
        %v1115 = vadd.f32 %v435, %v1114
        %1116 = vdwg.mxu0
        %1117 = vmatpush.msra.mxu0 0.0
        %1118 = vmatpush.msra.mxu0 0.0
        %1119 = vmatpush.msra.mxu0 0.0
        %1120 = vmatpush.msra.mxu0 0.0
        %1121 = vmatpush.msra.mxu0 0.0
        %1122 = vmatpush.msra.mxu0 0.0
        %1123 = vmatpush.msra.mxu0 0.0
        %1124 = vmatpush.msra.mxu0 0.0
        %1125 = vmatpush.msra.mxu0 0.0
        %1126 = vmatpush.msra.mxu0 0.0
        %1127 = vmatpush.msra.mxu0 0.0
        %1128 = vmatpush.msra.mxu0 0.0
        %1129 = vmatpush.msra.mxu0 %v392
        %1130 = vmatpush.msra.mxu0 %v391
        %1131 = vmatpush.msra.mxu0 %v390
        %1132 = vmatpush.msra.mxu0 %v389
        %1133 = vmatmul.f32.gmra.mxu0 %v439
        %v1134 = vpop.f32.mrf.mxu0
        %v1135 = vadd.f32 %v420, %v1134
        %1136 = vmatmul.f32.gmra.mxu0 %v442
        %v1137 = vpop.f32.mrf.mxu0
        %v1138 = vadd.f32 %v425, %v1137
        %1139 = vmatmul.f32.gmra.mxu0 %v445
        %v1140 = vpop.f32.mrf.mxu0
        %v1141 = vadd.f32 %v430, %v1140
        %1142 = vmatmul.f32.gmra.mxu0 %v448
        %v1143 = vpop.f32.mrf.mxu0
        %v1144 = vadd.f32 %v435, %v1143
        %1145 = vdwg.mxu0
        %1146 = vmatpush.msra.mxu0 0.0
        %1147 = vmatpush.msra.mxu0 0.0
        %1148 = vmatpush.msra.mxu0 0.0
        %1149 = vmatpush.msra.mxu0 0.0
        %1150 = vmatpush.msra.mxu0 0.0
        %1151 = vmatpush.msra.mxu0 0.0
        %1152 = vmatpush.msra.mxu0 0.0
        %1153 = vmatpush.msra.mxu0 0.0
        %1154 = vmatpush.msra.mxu0 0.0
        %1155 = vmatpush.msra.mxu0 0.0
        %1156 = vmatpush.msra.mxu0 0.0
        %1157 = vmatpush.msra.mxu0 0.0
        %1158 = vmatpush.msra.mxu0 %v396
        %1159 = vmatpush.msra.mxu0 %v395
        %1160 = vmatpush.msra.mxu0 %v394
        %1161 = vmatpush.msra.mxu0 %v393
        %1162 = vmatmul.f32.gmra.mxu0 %v439
        %v1163 = vpop.f32.mrf.mxu0
        %v1164 = vadd.f32 %v420, %v1163
        %1165 = vmatmul.f32.gmra.mxu0 %v442
        %v1166 = vpop.f32.mrf.mxu0
        %v1167 = vadd.f32 %v425, %v1166
        %1168 = vmatmul.f32.gmra.mxu0 %v445
        %v1169 = vpop.f32.mrf.mxu0
        %v1170 = vadd.f32 %v430, %v1169
        %1171 = vmatmul.f32.gmra.mxu0 %v448
        %v1172 = vpop.f32.mrf.mxu0
        %v1173 = vadd.f32 %v435, %v1172
        %1174 = vdwg.mxu0
        %1175 = vmatpush.msra.mxu0 0.0
        %1176 = vmatpush.msra.mxu0 0.0
        %1177 = vmatpush.msra.mxu0 0.0
        %1178 = vmatpush.msra.mxu0 0.0
        %1179 = vmatpush.msra.mxu0 0.0
        %1180 = vmatpush.msra.mxu0 0.0
        %1181 = vmatpush.msra.mxu0 0.0
        %1182 = vmatpush.msra.mxu0 0.0
        %1183 = vmatpush.msra.mxu0 0.0
        %1184 = vmatpush.msra.mxu0 0.0
        %1185 = vmatpush.msra.mxu0 0.0
        %1186 = vmatpush.msra.mxu0 0.0
        %1187 = vmatpush.msra.mxu0 %v400
        %1188 = vmatpush.msra.mxu0 %v399
        %1189 = vmatpush.msra.mxu0 %v398
        %1190 = vmatpush.msra.mxu0 %v397
        %1191 = vmatmul.f32.gmra.mxu0 %v439
        %v1192 = vpop.f32.mrf.mxu0
        %v1193 = vadd.f32 %v420, %v1192
        %1194 = vmatmul.f32.gmra.mxu0 %v442
        %v1195 = vpop.f32.mrf.mxu0
        %v1196 = vadd.f32 %v425, %v1195
        %1197 = vmatmul.f32.gmra.mxu0 %v445
        %v1198 = vpop.f32.mrf.mxu0
        %v1199 = vadd.f32 %v430, %v1198
        %1200 = vmatmul.f32.gmra.mxu0 %v448
        %v1201 = vpop.f32.mrf.mxu0
        %v1202 = vadd.f32 %v435, %v1201
        %1203 = vdwg.mxu0
        %1204 = vmatpush.msra.mxu0 0.0
        %1205 = vmatpush.msra.mxu0 0.0
        %1206 = vmatpush.msra.mxu0 0.0
        %1207 = vmatpush.msra.mxu0 0.0
        %1208 = vmatpush.msra.mxu0 0.0
        %1209 = vmatpush.msra.mxu0 0.0
        %1210 = vmatpush.msra.mxu0 0.0
        %1211 = vmatpush.msra.mxu0 0.0
        %1212 = vmatpush.msra.mxu0 0.0
        %1213 = vmatpush.msra.mxu0 0.0
        %1214 = vmatpush.msra.mxu0 0.0
        %1215 = vmatpush.msra.mxu0 0.0
        %1216 = vmatpush.msra.mxu0 %v404
        %1217 = vmatpush.msra.mxu0 %v403
        %1218 = vmatpush.msra.mxu0 %v402
        %1219 = vmatpush.msra.mxu0 %v401
        %1220 = vmatmul.f32.gmra.mxu0 %v439
        %v1221 = vpop.f32.mrf.mxu0
        %v1222 = vadd.f32 %v420, %v1221
        %1223 = vmatmul.f32.gmra.mxu0 %v442
        %v1224 = vpop.f32.mrf.mxu0
        %v1225 = vadd.f32 %v425, %v1224
        %1226 = vmatmul.f32.gmra.mxu0 %v445
        %v1227 = vpop.f32.mrf.mxu0
        %v1228 = vadd.f32 %v430, %v1227
        %1229 = vmatmul.f32.gmra.mxu0 %v448
        %v1230 = vpop.f32.mrf.mxu0
        %v1231 = vadd.f32 %v435, %v1230
        %1232 = vdwg.mxu0
        %1233 = vmatpush.msra.mxu0 0.0
        %1234 = vmatpush.msra.mxu0 0.0
        %1235 = vmatpush.msra.mxu0 0.0
        %1236 = vmatpush.msra.mxu0 0.0
        %1237 = vmatpush.msra.mxu0 0.0
        %1238 = vmatpush.msra.mxu0 0.0
        %1239 = vmatpush.msra.mxu0 0.0
        %1240 = vmatpush.msra.mxu0 0.0
        %1241 = vmatpush.msra.mxu0 0.0
        %1242 = vmatpush.msra.mxu0 0.0
        %1243 = vmatpush.msra.mxu0 0.0
        %1244 = vmatpush.msra.mxu0 0.0
        %1245 = vmatpush.msra.mxu0 %v408
        %1246 = vmatpush.msra.mxu0 %v407
        %1247 = vmatpush.msra.mxu0 %v406
        %1248 = vmatpush.msra.mxu0 %v405
        %1249 = vmatmul.f32.gmra.mxu0 %v439
        %v1250 = vpop.f32.mrf.mxu0
        %v1251 = vadd.f32 %v420, %v1250
        %1252 = vmatmul.f32.gmra.mxu0 %v442
        %v1253 = vpop.f32.mrf.mxu0
        %v1254 = vadd.f32 %v425, %v1253
        %1255 = vmatmul.f32.gmra.mxu0 %v445
        %v1256 = vpop.f32.mrf.mxu0
        %v1257 = vadd.f32 %v430, %v1256
        %1258 = vmatmul.f32.gmra.mxu0 %v448
        %v1259 = vpop.f32.mrf.mxu0
        %v1260 = vadd.f32 %v435, %v1259
        %1261 = vdwg.mxu0
        %v1262 = vmax.f32 %v468, 0.0
        %v1263 = vmax.f32 %v497, 0.0
        %v1264 = vmax.f32 %v526, 0.0
        %v1265 = vmax.f32 %v555, 0.0
        %v1266 = vmax.f32 %v584, 0.0
        %v1267 = vmax.f32 %v613, 0.0
        %v1268 = vmax.f32 %v642, 0.0
        %v1269 = vmax.f32 %v671, 0.0
        %v1270 = vmax.f32 %v700, 0.0
        %v1271 = vmax.f32 %v729, 0.0
        %v1272 = vmax.f32 %v758, 0.0
        %v1273 = vmax.f32 %v787, 0.0
        %v1274 = vmax.f32 %v816, 0.0
        %v1275 = vmax.f32 %v845, 0.0
        %v1276 = vmax.f32 %v874, 0.0
        %v1277 = vmax.f32 %v903, 0.0
        %v1278 = vmax.f32 %v932, 0.0
        %v1279 = vmax.f32 %v961, 0.0
        %v1280 = vmax.f32 %v990, 0.0
        %v1281 = vmax.f32 %v1019, 0.0
        %v1282 = vmax.f32 %v1048, 0.0
        %v1283 = vmax.f32 %v1077, 0.0
        %v1284 = vmax.f32 %v1106, 0.0
        %v1285 = vmax.f32 %v1135, 0.0
        %v1286 = vmax.f32 %v1164, 0.0
        %v1287 = vmax.f32 %v1193, 0.0
        %v1288 = vmax.f32 %v1222, 0.0
        %v1289 = vmax.f32 %v1251, 0.0
        %v1290 = vmax.f32 %v471, 0.0
        %v1291 = vmax.f32 %v500, 0.0
        %v1292 = vmax.f32 %v529, 0.0
        %v1293 = vmax.f32 %v558, 0.0
        %v1294 = vmax.f32 %v587, 0.0
        %v1295 = vmax.f32 %v616, 0.0
        %v1296 = vmax.f32 %v645, 0.0
        %v1297 = vmax.f32 %v674, 0.0
        %v1298 = vmax.f32 %v703, 0.0
        %v1299 = vmax.f32 %v732, 0.0
        %v1300 = vmax.f32 %v761, 0.0
        %v1301 = vmax.f32 %v790, 0.0
        %v1302 = vmax.f32 %v819, 0.0
        %v1303 = vmax.f32 %v848, 0.0
        %v1304 = vmax.f32 %v877, 0.0
        %v1305 = vmax.f32 %v906, 0.0
        %v1306 = vmax.f32 %v935, 0.0
        %v1307 = vmax.f32 %v964, 0.0
        %v1308 = vmax.f32 %v993, 0.0
        %v1309 = vmax.f32 %v1022, 0.0
        %v1310 = vmax.f32 %v1051, 0.0
        %v1311 = vmax.f32 %v1080, 0.0
        %v1312 = vmax.f32 %v1109, 0.0
        %v1313 = vmax.f32 %v1138, 0.0
        %v1314 = vmax.f32 %v1167, 0.0
        %v1315 = vmax.f32 %v1196, 0.0
        %v1316 = vmax.f32 %v1225, 0.0
        %v1317 = vmax.f32 %v1254, 0.0
        %v1318 = vmax.f32 %v474, 0.0
        %v1319 = vmax.f32 %v503, 0.0
        %v1320 = vmax.f32 %v532, 0.0
        %v1321 = vmax.f32 %v561, 0.0
        %v1322 = vmax.f32 %v590, 0.0
        %v1323 = vmax.f32 %v619, 0.0
        %v1324 = vmax.f32 %v648, 0.0
        %v1325 = vmax.f32 %v677, 0.0
        %v1326 = vmax.f32 %v706, 0.0
        %v1327 = vmax.f32 %v735, 0.0
        %v1328 = vmax.f32 %v764, 0.0
        %v1329 = vmax.f32 %v793, 0.0
        %v1330 = vmax.f32 %v822, 0.0
        %v1331 = vmax.f32 %v851, 0.0
        %v1332 = vmax.f32 %v880, 0.0
        %v1333 = vmax.f32 %v909, 0.0
        %v1334 = vmax.f32 %v938, 0.0
        %v1335 = vmax.f32 %v967, 0.0
        %v1336 = vmax.f32 %v996, 0.0
        %v1337 = vmax.f32 %v1025, 0.0
        %v1338 = vmax.f32 %v1054, 0.0
        %v1339 = vmax.f32 %v1083, 0.0
        %v1340 = vmax.f32 %v1112, 0.0
        %v1341 = vmax.f32 %v1141, 0.0
        %v1342 = vmax.f32 %v1170, 0.0
        %v1343 = vmax.f32 %v1199, 0.0
        %v1344 = vmax.f32 %v1228, 0.0
        %v1345 = vmax.f32 %v1257, 0.0
        %v1346 = vmax.f32 %v477, 0.0
        %v1347 = vmax.f32 %v506, 0.0
        %v1348 = vmax.f32 %v535, 0.0
        %v1349 = vmax.f32 %v564, 0.0
        %v1350 = vmax.f32 %v593, 0.0
        %v1351 = vmax.f32 %v622, 0.0
        %v1352 = vmax.f32 %v651, 0.0
        %v1353 = vmax.f32 %v680, 0.0
        %v1354 = vmax.f32 %v709, 0.0
        %v1355 = vmax.f32 %v738, 0.0
        %v1356 = vmax.f32 %v767, 0.0
        %v1357 = vmax.f32 %v796, 0.0
        %v1358 = vmax.f32 %v825, 0.0
        %v1359 = vmax.f32 %v854, 0.0
        %v1360 = vmax.f32 %v883, 0.0
        %v1361 = vmax.f32 %v912, 0.0
        %v1362 = vmax.f32 %v941, 0.0
        %v1363 = vmax.f32 %v970, 0.0
        %v1364 = vmax.f32 %v999, 0.0
        %v1365 = vmax.f32 %v1028, 0.0
        %v1366 = vmax.f32 %v1057, 0.0
        %v1367 = vmax.f32 %v1086, 0.0
        %v1368 = vmax.f32 %v1115, 0.0
        %v1369 = vmax.f32 %v1144, 0.0
        %v1370 = vmax.f32 %v1173, 0.0
        %v1371 = vmax.f32 %v1202, 0.0
        %v1372 = vmax.f32 %v1231, 0.0
        %v1373 = vmax.f32 %v1260, 0.0
        %v1374 = vld [vmem:[%s227] sm:$0xff]
        %v1375 = vld [vmem:[%s227 + $0x8] sm:$0xff]
        %v1376 = vld [vmem:[%s227 + $0x10] sm:$0xff]
        %v1377 = vld [vmem:[%s227 + $0x18] sm:$0xff]
        %v1378 = vmul.f32 %v1262, %v1374
        %v1379 = vmul.f32 %v1290, %v1375
        %v1380 = vmul.f32 %v1318, %v1376
        %v1381 = vmul.f32 %v1346, %v1377
        %v1382 = vadd.f32 %v1378, %v1379
        %v1383 = vadd.f32 %v1382, %v1380
        %v1384 = vadd.f32 %v1383, %v1381
        %v1385 = vrot.slane %v1384, 4
        %v1386 = vadd.f32 %v1384, %v1385
        %v1387 = vrot.slane %v1386, 2
        %v1388 = vadd.f32 %v1386, %v1387
        %v1389 = vrot.slane %v1388, 1
        %v1390 = vadd.f32 %v1388, %v1389
        %v1391 = vmul.f32 %v1263, %v1374
        %v1392 = vmul.f32 %v1291, %v1375
        %v1393 = vmul.f32 %v1319, %v1376
        %v1394 = vmul.f32 %v1347, %v1377
        %v1395 = vadd.f32 %v1391, %v1392
        %v1396 = vadd.f32 %v1395, %v1393
        %v1397 = vadd.f32 %v1396, %v1394
        %v1398 = vrot.slane %v1397, 4
        %v1399 = vadd.f32 %v1397, %v1398
        %v1400 = vrot.slane %v1399, 2
        %v1401 = vadd.f32 %v1399, %v1400
        %v1402 = vrot.slane %v1401, 1
        %v1403 = vadd.f32 %v1401, %v1402
        %v1404 = vmul.f32 %v1264, %v1374
        %v1405 = vmul.f32 %v1292, %v1375
        %v1406 = vmul.f32 %v1320, %v1376
        %v1407 = vmul.f32 %v1348, %v1377
        %v1408 = vadd.f32 %v1404, %v1405
        %v1409 = vadd.f32 %v1408, %v1406
        %v1410 = vadd.f32 %v1409, %v1407
        %v1411 = vrot.slane %v1410, 4
        %v1412 = vadd.f32 %v1410, %v1411
        %v1413 = vrot.slane %v1412, 2
        %v1414 = vadd.f32 %v1412, %v1413
        %v1415 = vrot.slane %v1414, 1
        %v1416 = vadd.f32 %v1414, %v1415
        %v1417 = vmul.f32 %v1265, %v1374
        %v1418 = vmul.f32 %v1293, %v1375
        %v1419 = vmul.f32 %v1321, %v1376
        %v1420 = vmul.f32 %v1349, %v1377
        %v1421 = vadd.f32 %v1417, %v1418
        %v1422 = vadd.f32 %v1421, %v1419
        %v1423 = vadd.f32 %v1422, %v1420
        %v1424 = vrot.slane %v1423, 4
        %v1425 = vadd.f32 %v1423, %v1424
        %v1426 = vrot.slane %v1425, 2
        %v1427 = vadd.f32 %v1425, %v1426
        %v1428 = vrot.slane %v1427, 1
        %v1429 = vadd.f32 %v1427, %v1428
        %v1430 = vmul.f32 %v1266, %v1374
        %v1431 = vmul.f32 %v1294, %v1375
        %v1432 = vmul.f32 %v1322, %v1376
        %v1433 = vmul.f32 %v1350, %v1377
        %v1434 = vadd.f32 %v1430, %v1431
        %v1435 = vadd.f32 %v1434, %v1432
        %v1436 = vadd.f32 %v1435, %v1433
        %v1437 = vrot.slane %v1436, 4
        %v1438 = vadd.f32 %v1436, %v1437
        %v1439 = vrot.slane %v1438, 2
        %v1440 = vadd.f32 %v1438, %v1439
        %v1441 = vrot.slane %v1440, 1
        %v1442 = vadd.f32 %v1440, %v1441
        %v1443 = vmul.f32 %v1267, %v1374
        %v1444 = vmul.f32 %v1295, %v1375
        %v1445 = vmul.f32 %v1323, %v1376
        %v1446 = vmul.f32 %v1351, %v1377
        %v1447 = vadd.f32 %v1443, %v1444
        %v1448 = vadd.f32 %v1447, %v1445
        %v1449 = vadd.f32 %v1448, %v1446
        %v1450 = vrot.slane %v1449, 4
        %v1451 = vadd.f32 %v1449, %v1450
        %v1452 = vrot.slane %v1451, 2
        %v1453 = vadd.f32 %v1451, %v1452
        %v1454 = vrot.slane %v1453, 1
        %v1455 = vadd.f32 %v1453, %v1454
        %v1456 = vmul.f32 %v1268, %v1374
        %v1457 = vmul.f32 %v1296, %v1375
        %v1458 = vmul.f32 %v1324, %v1376
        %v1459 = vmul.f32 %v1352, %v1377
        %v1460 = vadd.f32 %v1456, %v1457
        %v1461 = vadd.f32 %v1460, %v1458
        %v1462 = vadd.f32 %v1461, %v1459
        %v1463 = vrot.slane %v1462, 4
        %v1464 = vadd.f32 %v1462, %v1463
        %v1465 = vrot.slane %v1464, 2
        %v1466 = vadd.f32 %v1464, %v1465
        %v1467 = vrot.slane %v1466, 1
        %v1468 = vadd.f32 %v1466, %v1467
        %v1469 = vmul.f32 %v1269, %v1374
        %v1470 = vmul.f32 %v1297, %v1375
        %v1471 = vmul.f32 %v1325, %v1376
        %v1472 = vmul.f32 %v1353, %v1377
        %v1473 = vadd.f32 %v1469, %v1470
        %v1474 = vadd.f32 %v1473, %v1471
        %v1475 = vadd.f32 %v1474, %v1472
        %v1476 = vrot.slane %v1475, 4
        %v1477 = vadd.f32 %v1475, %v1476
        %v1478 = vrot.slane %v1477, 2
        %v1479 = vadd.f32 %v1477, %v1478
        %v1480 = vrot.slane %v1479, 1
        %v1481 = vadd.f32 %v1479, %v1480
        %v1482 = vmul.f32 %v1270, %v1374
        %v1483 = vmul.f32 %v1298, %v1375
        %v1484 = vmul.f32 %v1326, %v1376
        %v1485 = vmul.f32 %v1354, %v1377
        %v1486 = vadd.f32 %v1482, %v1483
        %v1487 = vadd.f32 %v1486, %v1484
        %v1488 = vadd.f32 %v1487, %v1485
        %v1489 = vrot.slane %v1488, 4
        %v1490 = vadd.f32 %v1488, %v1489
        %v1491 = vrot.slane %v1490, 2
        %v1492 = vadd.f32 %v1490, %v1491
        %v1493 = vrot.slane %v1492, 1
        %v1494 = vadd.f32 %v1492, %v1493
        %v1495 = vmul.f32 %v1271, %v1374
        %v1496 = vmul.f32 %v1299, %v1375
        %v1497 = vmul.f32 %v1327, %v1376
        %v1498 = vmul.f32 %v1355, %v1377
        %v1499 = vadd.f32 %v1495, %v1496
        %v1500 = vadd.f32 %v1499, %v1497
        %v1501 = vadd.f32 %v1500, %v1498
        %v1502 = vrot.slane %v1501, 4
        %v1503 = vadd.f32 %v1501, %v1502
        %v1504 = vrot.slane %v1503, 2
        %v1505 = vadd.f32 %v1503, %v1504
        %v1506 = vrot.slane %v1505, 1
        %v1507 = vadd.f32 %v1505, %v1506
        %v1508 = vmul.f32 %v1272, %v1374
        %v1509 = vmul.f32 %v1300, %v1375
        %v1510 = vmul.f32 %v1328, %v1376
        %v1511 = vmul.f32 %v1356, %v1377
        %v1512 = vadd.f32 %v1508, %v1509
        %v1513 = vadd.f32 %v1512, %v1510
        %v1514 = vadd.f32 %v1513, %v1511
        %v1515 = vrot.slane %v1514, 4
        %v1516 = vadd.f32 %v1514, %v1515
        %v1517 = vrot.slane %v1516, 2
        %v1518 = vadd.f32 %v1516, %v1517
        %v1519 = vrot.slane %v1518, 1
        %v1520 = vadd.f32 %v1518, %v1519
        %v1521 = vmul.f32 %v1273, %v1374
        %v1522 = vmul.f32 %v1301, %v1375
        %v1523 = vmul.f32 %v1329, %v1376
        %v1524 = vmul.f32 %v1357, %v1377
        %v1525 = vadd.f32 %v1521, %v1522
        %v1526 = vadd.f32 %v1525, %v1523
        %v1527 = vadd.f32 %v1526, %v1524
        %v1528 = vrot.slane %v1527, 4
        %v1529 = vadd.f32 %v1527, %v1528
        %v1530 = vrot.slane %v1529, 2
        %v1531 = vadd.f32 %v1529, %v1530
        %v1532 = vrot.slane %v1531, 1
        %v1533 = vadd.f32 %v1531, %v1532
        %v1534 = vmul.f32 %v1274, %v1374
        %v1535 = vmul.f32 %v1302, %v1375
        %v1536 = vmul.f32 %v1330, %v1376
        %v1537 = vmul.f32 %v1358, %v1377
        %v1538 = vadd.f32 %v1534, %v1535
        %v1539 = vadd.f32 %v1538, %v1536
        %v1540 = vadd.f32 %v1539, %v1537
        %v1541 = vrot.slane %v1540, 4
        %v1542 = vadd.f32 %v1540, %v1541
        %v1543 = vrot.slane %v1542, 2
        %v1544 = vadd.f32 %v1542, %v1543
        %v1545 = vrot.slane %v1544, 1
        %v1546 = vadd.f32 %v1544, %v1545
        %v1547 = vmul.f32 %v1275, %v1374
        %v1548 = vmul.f32 %v1303, %v1375
        %v1549 = vmul.f32 %v1331, %v1376
        %v1550 = vmul.f32 %v1359, %v1377
        %v1551 = vadd.f32 %v1547, %v1548
        %v1552 = vadd.f32 %v1551, %v1549
        %v1553 = vadd.f32 %v1552, %v1550
        %v1554 = vrot.slane %v1553, 4
        %v1555 = vadd.f32 %v1553, %v1554
        %v1556 = vrot.slane %v1555, 2
        %v1557 = vadd.f32 %v1555, %v1556
        %v1558 = vrot.slane %v1557, 1
        %v1559 = vadd.f32 %v1557, %v1558
        %v1560 = vmul.f32 %v1276, %v1374
        %v1561 = vmul.f32 %v1304, %v1375
        %v1562 = vmul.f32 %v1332, %v1376
        %v1563 = vmul.f32 %v1360, %v1377
        %v1564 = vadd.f32 %v1560, %v1561
        %v1565 = vadd.f32 %v1564, %v1562
        %v1566 = vadd.f32 %v1565, %v1563
        %v1567 = vrot.slane %v1566, 4
        %v1568 = vadd.f32 %v1566, %v1567
        %v1569 = vrot.slane %v1568, 2
        %v1570 = vadd.f32 %v1568, %v1569
        %v1571 = vrot.slane %v1570, 1
        %v1572 = vadd.f32 %v1570, %v1571
        %v1573 = vmul.f32 %v1277, %v1374
        %v1574 = vmul.f32 %v1305, %v1375
        %v1575 = vmul.f32 %v1333, %v1376
        %v1576 = vmul.f32 %v1361, %v1377
        %v1577 = vadd.f32 %v1573, %v1574
        %v1578 = vadd.f32 %v1577, %v1575
        %v1579 = vadd.f32 %v1578, %v1576
        %v1580 = vrot.slane %v1579, 4
        %v1581 = vadd.f32 %v1579, %v1580
        %v1582 = vrot.slane %v1581, 2
        %v1583 = vadd.f32 %v1581, %v1582
        %v1584 = vrot.slane %v1583, 1
        %v1585 = vadd.f32 %v1583, %v1584
        %v1586 = vmul.f32 %v1278, %v1374
        %v1587 = vmul.f32 %v1306, %v1375
        %v1588 = vmul.f32 %v1334, %v1376
        %v1589 = vmul.f32 %v1362, %v1377
        %v1590 = vadd.f32 %v1586, %v1587
        %v1591 = vadd.f32 %v1590, %v1588
        %v1592 = vadd.f32 %v1591, %v1589
        %v1593 = vrot.slane %v1592, 4
        %v1594 = vadd.f32 %v1592, %v1593
        %v1595 = vrot.slane %v1594, 2
        %v1596 = vadd.f32 %v1594, %v1595
        %v1597 = vrot.slane %v1596, 1
        %v1598 = vadd.f32 %v1596, %v1597
        %v1599 = vmul.f32 %v1279, %v1374
        %v1600 = vmul.f32 %v1307, %v1375
        %v1601 = vmul.f32 %v1335, %v1376
        %v1602 = vmul.f32 %v1363, %v1377
        %v1603 = vadd.f32 %v1599, %v1600
        %v1604 = vadd.f32 %v1603, %v1601
        %v1605 = vadd.f32 %v1604, %v1602
        %v1606 = vrot.slane %v1605, 4
        %v1607 = vadd.f32 %v1605, %v1606
        %v1608 = vrot.slane %v1607, 2
        %v1609 = vadd.f32 %v1607, %v1608
        %v1610 = vrot.slane %v1609, 1
        %v1611 = vadd.f32 %v1609, %v1610
        %v1612 = vmul.f32 %v1280, %v1374
        %v1613 = vmul.f32 %v1308, %v1375
        %v1614 = vmul.f32 %v1336, %v1376
        %v1615 = vmul.f32 %v1364, %v1377
        %v1616 = vadd.f32 %v1612, %v1613
        %v1617 = vadd.f32 %v1616, %v1614
        %v1618 = vadd.f32 %v1617, %v1615
        %v1619 = vrot.slane %v1618, 4
        %v1620 = vadd.f32 %v1618, %v1619
        %v1621 = vrot.slane %v1620, 2
        %v1622 = vadd.f32 %v1620, %v1621
        %v1623 = vrot.slane %v1622, 1
        %v1624 = vadd.f32 %v1622, %v1623
        %v1625 = vmul.f32 %v1281, %v1374
        %v1626 = vmul.f32 %v1309, %v1375
        %v1627 = vmul.f32 %v1337, %v1376
        %v1628 = vmul.f32 %v1365, %v1377
        %v1629 = vadd.f32 %v1625, %v1626
        %v1630 = vadd.f32 %v1629, %v1627
        %v1631 = vadd.f32 %v1630, %v1628
        %v1632 = vrot.slane %v1631, 4
        %v1633 = vadd.f32 %v1631, %v1632
        %v1634 = vrot.slane %v1633, 2
        %v1635 = vadd.f32 %v1633, %v1634
        %v1636 = vrot.slane %v1635, 1
        %v1637 = vadd.f32 %v1635, %v1636
        %v1638 = vmul.f32 %v1282, %v1374
        %v1639 = vmul.f32 %v1310, %v1375
        %v1640 = vmul.f32 %v1338, %v1376
        %v1641 = vmul.f32 %v1366, %v1377
        %v1642 = vadd.f32 %v1638, %v1639
        %v1643 = vadd.f32 %v1642, %v1640
        %v1644 = vadd.f32 %v1643, %v1641
        %v1645 = vrot.slane %v1644, 4
        %v1646 = vadd.f32 %v1644, %v1645
        %v1647 = vrot.slane %v1646, 2
        %v1648 = vadd.f32 %v1646, %v1647
        %v1649 = vrot.slane %v1648, 1
        %v1650 = vadd.f32 %v1648, %v1649
        %v1651 = vmul.f32 %v1283, %v1374
        %v1652 = vmul.f32 %v1311, %v1375
        %v1653 = vmul.f32 %v1339, %v1376
        %v1654 = vmul.f32 %v1367, %v1377
        %v1655 = vadd.f32 %v1651, %v1652
        %v1656 = vadd.f32 %v1655, %v1653
        %v1657 = vadd.f32 %v1656, %v1654
        %v1658 = vrot.slane %v1657, 4
        %v1659 = vadd.f32 %v1657, %v1658
        %v1660 = vrot.slane %v1659, 2
        %v1661 = vadd.f32 %v1659, %v1660
        %v1662 = vrot.slane %v1661, 1
        %v1663 = vadd.f32 %v1661, %v1662
        %v1664 = vmul.f32 %v1284, %v1374
        %v1665 = vmul.f32 %v1312, %v1375
        %v1666 = vmul.f32 %v1340, %v1376
        %v1667 = vmul.f32 %v1368, %v1377
        %v1668 = vadd.f32 %v1664, %v1665
        %v1669 = vadd.f32 %v1668, %v1666
        %v1670 = vadd.f32 %v1669, %v1667
        %v1671 = vrot.slane %v1670, 4
        %v1672 = vadd.f32 %v1670, %v1671
        %v1673 = vrot.slane %v1672, 2
        %v1674 = vadd.f32 %v1672, %v1673
        %v1675 = vrot.slane %v1674, 1
        %v1676 = vadd.f32 %v1674, %v1675
        %v1677 = vmul.f32 %v1285, %v1374
        %v1678 = vmul.f32 %v1313, %v1375
        %v1679 = vmul.f32 %v1341, %v1376
        %v1680 = vmul.f32 %v1369, %v1377
        %v1681 = vadd.f32 %v1677, %v1678
        %v1682 = vadd.f32 %v1681, %v1679
        %v1683 = vadd.f32 %v1682, %v1680
        %v1684 = vrot.slane %v1683, 4
        %v1685 = vadd.f32 %v1683, %v1684
        %v1686 = vrot.slane %v1685, 2
        %v1687 = vadd.f32 %v1685, %v1686
        %v1688 = vrot.slane %v1687, 1
        %v1689 = vadd.f32 %v1687, %v1688
        %v1690 = vmul.f32 %v1286, %v1374
        %v1691 = vmul.f32 %v1314, %v1375
        %v1692 = vmul.f32 %v1342, %v1376
        %v1693 = vmul.f32 %v1370, %v1377
        %v1694 = vadd.f32 %v1690, %v1691
        %v1695 = vadd.f32 %v1694, %v1692
        %v1696 = vadd.f32 %v1695, %v1693
        %v1697 = vrot.slane %v1696, 4
        %v1698 = vadd.f32 %v1696, %v1697
        %v1699 = vrot.slane %v1698, 2
        %v1700 = vadd.f32 %v1698, %v1699
        %v1701 = vrot.slane %v1700, 1
        %v1702 = vadd.f32 %v1700, %v1701
        %v1703 = vmul.f32 %v1287, %v1374
        %v1704 = vmul.f32 %v1315, %v1375
        %v1705 = vmul.f32 %v1343, %v1376
        %v1706 = vmul.f32 %v1371, %v1377
        %v1707 = vadd.f32 %v1703, %v1704
        %v1708 = vadd.f32 %v1707, %v1705
        %v1709 = vadd.f32 %v1708, %v1706
        %v1710 = vrot.slane %v1709, 4
        %v1711 = vadd.f32 %v1709, %v1710
        %v1712 = vrot.slane %v1711, 2
        %v1713 = vadd.f32 %v1711, %v1712
        %v1714 = vrot.slane %v1713, 1
        %v1715 = vadd.f32 %v1713, %v1714
        %v1716 = vmul.f32 %v1288, %v1374
        %v1717 = vmul.f32 %v1316, %v1375
        %v1718 = vmul.f32 %v1344, %v1376
        %v1719 = vmul.f32 %v1372, %v1377
        %v1720 = vadd.f32 %v1716, %v1717
        %v1721 = vadd.f32 %v1720, %v1718
        %v1722 = vadd.f32 %v1721, %v1719
        %v1723 = vrot.slane %v1722, 4
        %v1724 = vadd.f32 %v1722, %v1723
        %v1725 = vrot.slane %v1724, 2
        %v1726 = vadd.f32 %v1724, %v1725
        %v1727 = vrot.slane %v1726, 1
        %v1728 = vadd.f32 %v1726, %v1727
        %v1729 = vmul.f32 %v1289, %v1374
        %v1730 = vmul.f32 %v1317, %v1375
        %v1731 = vmul.f32 %v1345, %v1376
        %v1732 = vmul.f32 %v1373, %v1377
        %v1733 = vadd.f32 %v1729, %v1730
        %v1734 = vadd.f32 %v1733, %v1731
        %v1735 = vadd.f32 %v1734, %v1732
        %v1736 = vrot.slane %v1735, 4
        %v1737 = vadd.f32 %v1735, %v1736
        %v1738 = vrot.slane %v1737, 2
        %v1739 = vadd.f32 %v1737, %v1738
        %v1740 = vrot.slane %v1739, 1
        %v1741 = vadd.f32 %v1739, %v1740
        %v1742 = vmax.f32 %v1390, %v1403
        %v1743 = vmax.f32 %v1742, %v1416
        %v1744 = vmax.f32 %v1743, %v1429
        %v1745 = vmax.f32 %v1744, %v1442
        %v1746 = vmax.f32 %v1745, %v1455
        %v1747 = vmax.f32 %v1746, %v1468
        %v1748 = vmax.f32 %v1747, %v1481
        %v1749 = vmax.f32 %v1748, %v1494
        %v1750 = vmax.f32 %v1749, %v1507
        %v1751 = vmax.f32 %v1750, %v1520
        %v1752 = vmax.f32 %v1751, %v1533
        %v1753 = vmax.f32 %v1752, %v1546
        %v1754 = vmax.f32 %v1753, %v1559
        %v1755 = vmax.f32 %v1754, %v1572
        %v1756 = vmax.f32 %v1755, %v1585
        %v1757 = vmax.f32 %v1756, %v1598
        %v1758 = vmax.f32 %v1757, %v1611
        %v1759 = vmax.f32 %v1758, %v1624
        %v1760 = vmax.f32 %v1759, %v1637
        %v1761 = vmax.f32 %v1760, %v1650
        %v1762 = vmax.f32 %v1761, %v1663
        %v1763 = vmax.f32 %v1762, %v1676
        %v1764 = vmax.f32 %v1763, %v1689
        %v1765 = vmax.f32 %v1764, %v1702
        %v1766 = vmax.f32 %v1765, %v1715
        %v1767 = vmax.f32 %v1766, %v1728
        %v1768 = vmax.f32 %v1767, %v1741
        %v1769 = vsub.f32 %v1390, %v1768
        %v1770 = vmul.f32 %v1769, 1.442695
        %v1771 = vpow.pop %v1770
        %v1772 = vsub.f32 %v1403, %v1768
        %v1773 = vmul.f32 %v1772, 1.442695
        %v1774 = vpow.pop %v1773
        %v1775 = vsub.f32 %v1416, %v1768
        %v1776 = vmul.f32 %v1775, 1.442695
        %v1777 = vpow.pop %v1776
        %v1778 = vsub.f32 %v1429, %v1768
        %v1779 = vmul.f32 %v1778, 1.442695
        %v1780 = vpow.pop %v1779
        %v1781 = vsub.f32 %v1442, %v1768
        %v1782 = vmul.f32 %v1781, 1.442695
        %v1783 = vpow.pop %v1782
        %v1784 = vsub.f32 %v1455, %v1768
        %v1785 = vmul.f32 %v1784, 1.442695
        %v1786 = vpow.pop %v1785
        %v1787 = vsub.f32 %v1468, %v1768
        %v1788 = vmul.f32 %v1787, 1.442695
        %v1789 = vpow.pop %v1788
        %v1790 = vsub.f32 %v1481, %v1768
        %v1791 = vmul.f32 %v1790, 1.442695
        %v1792 = vpow.pop %v1791
        %v1793 = vsub.f32 %v1494, %v1768
        %v1794 = vmul.f32 %v1793, 1.442695
        %v1795 = vpow.pop %v1794
        %v1796 = vsub.f32 %v1507, %v1768
        %v1797 = vmul.f32 %v1796, 1.442695
        %v1798 = vpow.pop %v1797
        %v1799 = vsub.f32 %v1520, %v1768
        %v1800 = vmul.f32 %v1799, 1.442695
        %v1801 = vpow.pop %v1800
        %v1802 = vsub.f32 %v1533, %v1768
        %v1803 = vmul.f32 %v1802, 1.442695
        %v1804 = vpow.pop %v1803
        %v1805 = vsub.f32 %v1546, %v1768
        %v1806 = vmul.f32 %v1805, 1.442695
        %v1807 = vpow.pop %v1806
        %v1808 = vsub.f32 %v1559, %v1768
        %v1809 = vmul.f32 %v1808, 1.442695
        %v1810 = vpow.pop %v1809
        %v1811 = vsub.f32 %v1572, %v1768
        %v1812 = vmul.f32 %v1811, 1.442695
        %v1813 = vpow.pop %v1812
        %v1814 = vsub.f32 %v1585, %v1768
        %v1815 = vmul.f32 %v1814, 1.442695
        %v1816 = vpow.pop %v1815
        %v1817 = vsub.f32 %v1598, %v1768
        %v1818 = vmul.f32 %v1817, 1.442695
        %v1819 = vpow.pop %v1818
        %v1820 = vsub.f32 %v1611, %v1768
        %v1821 = vmul.f32 %v1820, 1.442695
        %v1822 = vpow.pop %v1821
        %v1823 = vsub.f32 %v1624, %v1768
        %v1824 = vmul.f32 %v1823, 1.442695
        %v1825 = vpow.pop %v1824
        %v1826 = vsub.f32 %v1637, %v1768
        %v1827 = vmul.f32 %v1826, 1.442695
        %v1828 = vpow.pop %v1827
        %v1829 = vsub.f32 %v1650, %v1768
        %v1830 = vmul.f32 %v1829, 1.442695
        %v1831 = vpow.pop %v1830
        %v1832 = vsub.f32 %v1663, %v1768
        %v1833 = vmul.f32 %v1832, 1.442695
        %v1834 = vpow.pop %v1833
        %v1835 = vsub.f32 %v1676, %v1768
        %v1836 = vmul.f32 %v1835, 1.442695
        %v1837 = vpow.pop %v1836
        %v1838 = vsub.f32 %v1689, %v1768
        %v1839 = vmul.f32 %v1838, 1.442695
        %v1840 = vpow.pop %v1839
        %v1841 = vsub.f32 %v1702, %v1768
        %v1842 = vmul.f32 %v1841, 1.442695
        %v1843 = vpow.pop %v1842
        %v1844 = vsub.f32 %v1715, %v1768
        %v1845 = vmul.f32 %v1844, 1.442695
        %v1846 = vpow.pop %v1845
        %v1847 = vsub.f32 %v1728, %v1768
        %v1848 = vmul.f32 %v1847, 1.442695
        %v1849 = vpow.pop %v1848
        %v1850 = vsub.f32 %v1741, %v1768
        %v1851 = vmul.f32 %v1850, 1.442695
        %v1852 = vpow.pop %v1851
        %v1853 = vadd.f32 %v1771, %v1774
        %v1854 = vadd.f32 %v1853, %v1777
        %v1855 = vadd.f32 %v1854, %v1780
        %v1856 = vadd.f32 %v1855, %v1783
        %v1857 = vadd.f32 %v1856, %v1786
        %v1858 = vadd.f32 %v1857, %v1789
        %v1859 = vadd.f32 %v1858, %v1792
        %v1860 = vadd.f32 %v1859, %v1795
        %v1861 = vadd.f32 %v1860, %v1798
        %v1862 = vadd.f32 %v1861, %v1801
        %v1863 = vadd.f32 %v1862, %v1804
        %v1864 = vadd.f32 %v1863, %v1807
        %v1865 = vadd.f32 %v1864, %v1810
        %v1866 = vadd.f32 %v1865, %v1813
        %v1867 = vadd.f32 %v1866, %v1816
        %v1868 = vadd.f32 %v1867, %v1819
        %v1869 = vadd.f32 %v1868, %v1822
        %v1870 = vadd.f32 %v1869, %v1825
        %v1871 = vadd.f32 %v1870, %v1828
        %v1872 = vadd.f32 %v1871, %v1831
        %v1873 = vadd.f32 %v1872, %v1834
        %v1874 = vadd.f32 %v1873, %v1837
        %v1875 = vadd.f32 %v1874, %v1840
        %v1876 = vadd.f32 %v1875, %v1843
        %v1877 = vadd.f32 %v1876, %v1846
        %v1878 = vadd.f32 %v1877, %v1849
        %v1879 = vadd.f32 %v1878, %v1852
        %v1880 = vrcp.pop %v1879
        %v1881 = vmul.f32 %v1879, %v1880
        %v1882 = vsub.f32 2.0, %v1881
        %v1883 = vmul.f32 %v1880, %v1882
        %v1884 = vmul.f32 %v1883, 28.0
        %v1885 = vmul.f32 %v1771, %v1884
        %v1886 = vmul.f32 %v297, %v1885
        %v1887 = vmul.f32 %v298, %v1885
        %v1888 = vmul.f32 %v299, %v1885
        %v1889 = vmul.f32 %v300, %v1885
        %v1890 = vmul.f32 %v1774, %v1884
        %v1891 = vmul.f32 %v301, %v1890
        %v1892 = vmul.f32 %v302, %v1890
        %v1893 = vmul.f32 %v303, %v1890
        %v1894 = vmul.f32 %v304, %v1890
        %v1895 = vadd.f32 %v1886, %v1891
        %v1896 = vadd.f32 %v1887, %v1892
        %v1897 = vadd.f32 %v1888, %v1893
        %v1898 = vadd.f32 %v1889, %v1894
        %v1899 = vmul.f32 %v1777, %v1884
        %v1900 = vmul.f32 %v305, %v1899
        %v1901 = vmul.f32 %v306, %v1899
        %v1902 = vmul.f32 %v307, %v1899
        %v1903 = vmul.f32 %v308, %v1899
        %v1904 = vadd.f32 %v1895, %v1900
        %v1905 = vadd.f32 %v1896, %v1901
        %v1906 = vadd.f32 %v1897, %v1902
        %v1907 = vadd.f32 %v1898, %v1903
        %v1908 = vmul.f32 %v1780, %v1884
        %v1909 = vmul.f32 %v309, %v1908
        %v1910 = vmul.f32 %v310, %v1908
        %v1911 = vmul.f32 %v311, %v1908
        %v1912 = vmul.f32 %v312, %v1908
        %v1913 = vadd.f32 %v1904, %v1909
        %v1914 = vadd.f32 %v1905, %v1910
        %v1915 = vadd.f32 %v1906, %v1911
        %v1916 = vadd.f32 %v1907, %v1912
        %v1917 = vmul.f32 %v1783, %v1884
        %v1918 = vmul.f32 %v313, %v1917
        %v1919 = vmul.f32 %v314, %v1917
        %v1920 = vmul.f32 %v315, %v1917
        %v1921 = vmul.f32 %v316, %v1917
        %v1922 = vadd.f32 %v1913, %v1918
        %v1923 = vadd.f32 %v1914, %v1919
        %v1924 = vadd.f32 %v1915, %v1920
        %v1925 = vadd.f32 %v1916, %v1921
        %v1926 = vmul.f32 %v1786, %v1884
        %v1927 = vmul.f32 %v317, %v1926
        %v1928 = vmul.f32 %v318, %v1926
        %v1929 = vmul.f32 %v319, %v1926
        %v1930 = vmul.f32 %v320, %v1926
        %v1931 = vadd.f32 %v1922, %v1927
        %v1932 = vadd.f32 %v1923, %v1928
        %v1933 = vadd.f32 %v1924, %v1929
        %v1934 = vadd.f32 %v1925, %v1930
        %v1935 = vmul.f32 %v1789, %v1884
        %v1936 = vmul.f32 %v321, %v1935
        %v1937 = vmul.f32 %v322, %v1935
        %v1938 = vmul.f32 %v323, %v1935
        %v1939 = vmul.f32 %v324, %v1935
        %v1940 = vadd.f32 %v1931, %v1936
        %v1941 = vadd.f32 %v1932, %v1937
        %v1942 = vadd.f32 %v1933, %v1938
        %v1943 = vadd.f32 %v1934, %v1939
        %v1944 = vmul.f32 %v1792, %v1884
        %v1945 = vmul.f32 %v325, %v1944
        %v1946 = vmul.f32 %v326, %v1944
        %v1947 = vmul.f32 %v327, %v1944
        %v1948 = vmul.f32 %v328, %v1944
        %v1949 = vadd.f32 %v1940, %v1945
        %v1950 = vadd.f32 %v1941, %v1946
        %v1951 = vadd.f32 %v1942, %v1947
        %v1952 = vadd.f32 %v1943, %v1948
        %v1953 = vmul.f32 %v1795, %v1884
        %v1954 = vmul.f32 %v329, %v1953
        %v1955 = vmul.f32 %v330, %v1953
        %v1956 = vmul.f32 %v331, %v1953
        %v1957 = vmul.f32 %v332, %v1953
        %v1958 = vadd.f32 %v1949, %v1954
        %v1959 = vadd.f32 %v1950, %v1955
        %v1960 = vadd.f32 %v1951, %v1956
        %v1961 = vadd.f32 %v1952, %v1957
        %v1962 = vmul.f32 %v1798, %v1884
        %v1963 = vmul.f32 %v333, %v1962
        %v1964 = vmul.f32 %v334, %v1962
        %v1965 = vmul.f32 %v335, %v1962
        %v1966 = vmul.f32 %v336, %v1962
        %v1967 = vadd.f32 %v1958, %v1963
        %v1968 = vadd.f32 %v1959, %v1964
        %v1969 = vadd.f32 %v1960, %v1965
        %v1970 = vadd.f32 %v1961, %v1966
        %v1971 = vmul.f32 %v1801, %v1884
        %v1972 = vmul.f32 %v337, %v1971
        %v1973 = vmul.f32 %v338, %v1971
        %v1974 = vmul.f32 %v339, %v1971
        %v1975 = vmul.f32 %v340, %v1971
        %v1976 = vadd.f32 %v1967, %v1972
        %v1977 = vadd.f32 %v1968, %v1973
        %v1978 = vadd.f32 %v1969, %v1974
        %v1979 = vadd.f32 %v1970, %v1975
        %v1980 = vmul.f32 %v1804, %v1884
        %v1981 = vmul.f32 %v341, %v1980
        %v1982 = vmul.f32 %v342, %v1980
        %v1983 = vmul.f32 %v343, %v1980
        %v1984 = vmul.f32 %v344, %v1980
        %v1985 = vadd.f32 %v1976, %v1981
        %v1986 = vadd.f32 %v1977, %v1982
        %v1987 = vadd.f32 %v1978, %v1983
        %v1988 = vadd.f32 %v1979, %v1984
        %v1989 = vmul.f32 %v1807, %v1884
        %v1990 = vmul.f32 %v345, %v1989
        %v1991 = vmul.f32 %v346, %v1989
        %v1992 = vmul.f32 %v347, %v1989
        %v1993 = vmul.f32 %v348, %v1989
        %v1994 = vadd.f32 %v1985, %v1990
        %v1995 = vadd.f32 %v1986, %v1991
        %v1996 = vadd.f32 %v1987, %v1992
        %v1997 = vadd.f32 %v1988, %v1993
        %v1998 = vmul.f32 %v1810, %v1884
        %v1999 = vmul.f32 %v349, %v1998
        %v2000 = vmul.f32 %v350, %v1998
        %v2001 = vmul.f32 %v351, %v1998
        %v2002 = vmul.f32 %v352, %v1998
        %v2003 = vadd.f32 %v1994, %v1999
        %v2004 = vadd.f32 %v1995, %v2000
        %v2005 = vadd.f32 %v1996, %v2001
        %v2006 = vadd.f32 %v1997, %v2002
        %v2007 = vmul.f32 %v1813, %v1884
        %v2008 = vmul.f32 %v353, %v2007
        %v2009 = vmul.f32 %v354, %v2007
        %v2010 = vmul.f32 %v355, %v2007
        %v2011 = vmul.f32 %v356, %v2007
        %v2012 = vadd.f32 %v2003, %v2008
        %v2013 = vadd.f32 %v2004, %v2009
        %v2014 = vadd.f32 %v2005, %v2010
        %v2015 = vadd.f32 %v2006, %v2011
        %v2016 = vmul.f32 %v1816, %v1884
        %v2017 = vmul.f32 %v357, %v2016
        %v2018 = vmul.f32 %v358, %v2016
        %v2019 = vmul.f32 %v359, %v2016
        %v2020 = vmul.f32 %v360, %v2016
        %v2021 = vadd.f32 %v2012, %v2017
        %v2022 = vadd.f32 %v2013, %v2018
        %v2023 = vadd.f32 %v2014, %v2019
        %v2024 = vadd.f32 %v2015, %v2020
        %v2025 = vmul.f32 %v1819, %v1884
        %v2026 = vmul.f32 %v361, %v2025
        %v2027 = vmul.f32 %v362, %v2025
        %v2028 = vmul.f32 %v363, %v2025
        %v2029 = vmul.f32 %v364, %v2025
        %v2030 = vadd.f32 %v2021, %v2026
        %v2031 = vadd.f32 %v2022, %v2027
        %v2032 = vadd.f32 %v2023, %v2028
        %v2033 = vadd.f32 %v2024, %v2029
        %v2034 = vmul.f32 %v1822, %v1884
        %v2035 = vmul.f32 %v365, %v2034
        %v2036 = vmul.f32 %v366, %v2034
        %v2037 = vmul.f32 %v367, %v2034
        %v2038 = vmul.f32 %v368, %v2034
        %v2039 = vadd.f32 %v2030, %v2035
        %v2040 = vadd.f32 %v2031, %v2036
        %v2041 = vadd.f32 %v2032, %v2037
        %v2042 = vadd.f32 %v2033, %v2038
        %v2043 = vmul.f32 %v1825, %v1884
        %v2044 = vmul.f32 %v369, %v2043
        %v2045 = vmul.f32 %v370, %v2043
        %v2046 = vmul.f32 %v371, %v2043
        %v2047 = vmul.f32 %v372, %v2043
        %v2048 = vadd.f32 %v2039, %v2044
        %v2049 = vadd.f32 %v2040, %v2045
        %v2050 = vadd.f32 %v2041, %v2046
        %v2051 = vadd.f32 %v2042, %v2047
        %v2052 = vmul.f32 %v1828, %v1884
        %v2053 = vmul.f32 %v373, %v2052
        %v2054 = vmul.f32 %v374, %v2052
        %v2055 = vmul.f32 %v375, %v2052
        %v2056 = vmul.f32 %v376, %v2052
        %v2057 = vadd.f32 %v2048, %v2053
        %v2058 = vadd.f32 %v2049, %v2054
        %v2059 = vadd.f32 %v2050, %v2055
        %v2060 = vadd.f32 %v2051, %v2056
        %v2061 = vmul.f32 %v1831, %v1884
        %v2062 = vmul.f32 %v377, %v2061
        %v2063 = vmul.f32 %v378, %v2061
        %v2064 = vmul.f32 %v379, %v2061
        %v2065 = vmul.f32 %v380, %v2061
        %v2066 = vadd.f32 %v2057, %v2062
        %v2067 = vadd.f32 %v2058, %v2063
        %v2068 = vadd.f32 %v2059, %v2064
        %v2069 = vadd.f32 %v2060, %v2065
        %v2070 = vmul.f32 %v1834, %v1884
        %v2071 = vmul.f32 %v381, %v2070
        %v2072 = vmul.f32 %v382, %v2070
        %v2073 = vmul.f32 %v383, %v2070
        %v2074 = vmul.f32 %v384, %v2070
        %v2075 = vadd.f32 %v2066, %v2071
        %v2076 = vadd.f32 %v2067, %v2072
        %v2077 = vadd.f32 %v2068, %v2073
        %v2078 = vadd.f32 %v2069, %v2074
        %v2079 = vmul.f32 %v1837, %v1884
        %v2080 = vmul.f32 %v385, %v2079
        %v2081 = vmul.f32 %v386, %v2079
        %v2082 = vmul.f32 %v387, %v2079
        %v2083 = vmul.f32 %v388, %v2079
        %v2084 = vadd.f32 %v2075, %v2080
        %v2085 = vadd.f32 %v2076, %v2081
        %v2086 = vadd.f32 %v2077, %v2082
        %v2087 = vadd.f32 %v2078, %v2083
        %v2088 = vmul.f32 %v1840, %v1884
        %v2089 = vmul.f32 %v389, %v2088
        %v2090 = vmul.f32 %v390, %v2088
        %v2091 = vmul.f32 %v391, %v2088
        %v2092 = vmul.f32 %v392, %v2088
        %v2093 = vadd.f32 %v2084, %v2089
        %v2094 = vadd.f32 %v2085, %v2090
        %v2095 = vadd.f32 %v2086, %v2091
        %v2096 = vadd.f32 %v2087, %v2092
        %v2097 = vmul.f32 %v1843, %v1884
        %v2098 = vmul.f32 %v393, %v2097
        %v2099 = vmul.f32 %v394, %v2097
        %v2100 = vmul.f32 %v395, %v2097
        %v2101 = vmul.f32 %v396, %v2097
        %v2102 = vadd.f32 %v2093, %v2098
        %v2103 = vadd.f32 %v2094, %v2099
        %v2104 = vadd.f32 %v2095, %v2100
        %v2105 = vadd.f32 %v2096, %v2101
        %v2106 = vmul.f32 %v1846, %v1884
        %v2107 = vmul.f32 %v397, %v2106
        %v2108 = vmul.f32 %v398, %v2106
        %v2109 = vmul.f32 %v399, %v2106
        %v2110 = vmul.f32 %v400, %v2106
        %v2111 = vadd.f32 %v2102, %v2107
        %v2112 = vadd.f32 %v2103, %v2108
        %v2113 = vadd.f32 %v2104, %v2109
        %v2114 = vadd.f32 %v2105, %v2110
        %v2115 = vmul.f32 %v1849, %v1884
        %v2116 = vmul.f32 %v401, %v2115
        %v2117 = vmul.f32 %v402, %v2115
        %v2118 = vmul.f32 %v403, %v2115
        %v2119 = vmul.f32 %v404, %v2115
        %v2120 = vadd.f32 %v2111, %v2116
        %v2121 = vadd.f32 %v2112, %v2117
        %v2122 = vadd.f32 %v2113, %v2118
        %v2123 = vadd.f32 %v2114, %v2119
        %v2124 = vmul.f32 %v1852, %v1884
        %v2125 = vmul.f32 %v405, %v2124
        %v2126 = vmul.f32 %v406, %v2124
        %v2127 = vmul.f32 %v407, %v2124
        %v2128 = vmul.f32 %v408, %v2124
        %v2129 = vadd.f32 %v2120, %v2125
        %v2130 = vadd.f32 %v2121, %v2126
        %v2131 = vadd.f32 %v2122, %v2127
        %v2132 = vadd.f32 %v2123, %v2128
        %2133 = vst [vmem:[%s257] sm:$0xff] %v1374
        %2134 = vst [vmem:[%s257 + $0x8] sm:$0xff] %v1375
        %2135 = vst [vmem:[%s257 + $0x10] sm:$0xff] %v1376
        %2136 = vst [vmem:[%s257 + $0x18] sm:$0xff] %v1377
        %2137 = vst [vmem:[%s257 + $0x20] sm:$0xff] %v2129
        %2138 = vst [vmem:[%s257 + $0x28] sm:$0xff] %v2130
        %2139 = vst [vmem:[%s257 + $0x30] sm:$0xff] %v2131
        %2140 = vst [vmem:[%s257 + $0x38] sm:$0xff] %v2132
        %s2141 = sand.u32 %s126, 1
        %s2142 = scalar_lea.sflag [#allocation4], %s2141
        %s2143 = sand.u32 %s126, 1
        %s2144 = smul.addr %s2143, 64
        %s2145 = scalar_lea.vmem [#allocation7], %s2144
        // Predicated region
        $region45: #{tpu_custom_call.1} parent=35 // pred_check
          %p2146 = pneg %p136
        $region46: #{tpu_custom_call.1} parent=35 // pred_check_branch
          %2148 = sbr.rel (%p2146) target = $region48
        $region47: #{tpu_custom_call.1} parent=35 // pred_region
          %2150 = vsyncadd %s2142, 0
          %s2151 = smul.addr %s24, 8
          %s2152 = scalar_lea.hbm %s4, %s2151
          %s2153 = sshll.u32 %s2145, 4
          %s2154 = int_to_ptr.vmem [resolvable:$true] %s2153
          %s2155 = sshll.u32 %s2152, 4
          %s2156 = int_to_ptr.hbm [resolvable:$true] %s2155
          %2161 = dma.vmem_to_hbm [thread:$0]  %s2154, 1024, %s2156, %s2142, 128, 256, 8
        $region48: #{tpu_custom_call.1} parent=35 // pred_fallthru
          _
      $region36: #{tpu_custom_call.1} parent=5 // pred_fallthru
        _
      %p2162 = scmp.le.s32.totalorder 2, %s19
      // Predicated region
      $region49: #{tpu_custom_call.1} parent=5 // pred_check
        %p2163 = pneg %p2162
      $region50: #{tpu_custom_call.1} parent=5 // pred_check_branch
        %2165 = sbr.rel (%p2163) target = $region52
      $region51: #{tpu_custom_call.1} parent=5 // pred_region
        %s2166 = ssub.s32 %s19, 2
        // Predicated region
        $region53: #{tpu_custom_call.1} parent=51 // pred_check
          %p2167 = pneg %p142
        $region54: #{tpu_custom_call.1} parent=51 // pred_check_branch
          %2169 = sbr.rel (%p2167) target = $region56
        $region55: #{tpu_custom_call.1} parent=51 // pred_region
          %s2170 = sand.u32 %s127, 1
          %s2171 = scalar_lea.sflag [#allocation4], %s2170
          %s2172 = sand.u32 %s127, 1
          %s2173 = smul.addr %s2172, 64
          %s2174 = scalar_lea.vmem [#allocation7], %s2173
          %2176 = dma.done %s2171, 1024
        $region56: #{tpu_custom_call.1} parent=51 // pred_fallthru
          _
      $region52: #{tpu_custom_call.1} parent=5 // pred_fallthru
        _
    $region6: #{tpu_custom_call.1} parent=1 // loop_footer
      %s23 = sadd.s32 1, %s19
    $region7: #{tpu_custom_call.1} parent=1 // loop_footer_branch
      %18 = sbr.rel target = $region3
    $region8: #{tpu_custom_call.1} parent=1 // loop_exit
      _
    %2177 = vsyncpa [#allocation3], 1
    %s2178 = scalar_lea.sflag [#allocation3], 1
    %2179 = vsyncpa %s2178, 1
    %2180 = vsyncpa [#allocation6], 1
    %s2181 = scalar_lea.sflag [#allocation6], 1
    %2182 = vsyncpa %s2181, 1
    %2183 = vsyncpa [#allocation4], 1
    %s2184 = scalar_lea.sflag [#allocation4], 1
    %2185 = vsyncpa %s2184, 1

</llo_original>
